<compile_context>
chip_gen: v7x
topology: tpu7x:2x2x1
jax: 0.10.0
libtpu: 0.0.40
codegen_flags: <defaults>
</compile_context>

<pallas_src>
import functools

import jax
import jax.numpy as jnp
import numpy as np
from jax import lax
from jax.experimental import pallas as pl
from jax.experimental.pallas import tpu as pltpu

KSIZE = 7
PAD = 3
# <= v7x per-core physical VMEM (64 MiB) with headroom; well above the v5e/v6e
# default scoped limits (16/32 MiB).
VMEM_LIMIT_BYTES = 48 * 1024 * 1024


def _round_up(v, m):
    return (v + m - 1) // m * m


def _rows_to_plane(flat, H, W):
    """(1, >=H*W) -> (H, W) via per-row lane slices + sublane concat (no reshape)."""
    return jnp.concatenate([flat[:, i * W:(i + 1) * W] for i in range(H)], axis=0)


def _plane_to_row(plane, H, W):
    """(H, W) -> (1, H*W) via per-row sublane slices + lane concat (no reshape)."""
    return jnp.concatenate([plane[i:i + 1, :] for i in range(H)], axis=1)


def _pad_rows(plane, HP):
    """(H, W) -> (HP, W): PAD zero rows on top (the conv's vertical halo), rest below."""
    H, W = plane.shape
    return jnp.concatenate(
        [jnp.zeros((PAD, W), plane.dtype), plane,
         jnp.zeros((HP - H - PAD, W), plane.dtype)], axis=0)


def _build_toeplitz(w_sa, W):
    """Banded (KSIZE, 2*W, W) matrices folding the 7x7 conv's kx (lane) dimension
    into MXU matmuls. Rows [0, W) hold the mean-channel weights, rows [W, 2W)
    the max-channel weights; horizontal zero-padding is implicit in the band."""
    w = np.asarray(w_sa, np.float32).reshape(2, KSIZE, KSIZE)
    t = np.zeros((KSIZE, 2 * W, W), np.float32)
    for ky in range(KSIZE):
        for kx in range(KSIZE):
            dx = kx - PAD
            for wo in range(max(0, -dx), min(W, W - dx)):
                wi = wo + dx
                t[ky, wi, wo] = w[0, ky, kx]
                t[ky, W + wi, wo] = w[1, ky, kx]
    return jnp.asarray(t)


def _choose_nb(N, per_sample_io_bytes):
    """Batch-per-step so each grid step moves a reasonable amount of HBM traffic
    (~1 MiB: past the measured knee on all generations, and within v5e's
    guidance of not over-growing blocks), while fitting VMEM and keeping the
    grid length >= 2 for v7x's two TensorCores."""
    target = 1 << 20
    cap = max(1, target // max(per_sample_io_bytes, 1))
    cap = min(cap, max(1, (VMEM_LIMIT_BYTES // 3) // max(per_sample_io_bytes, 1)))
    if N >= 2:
        cap = min(cap, N // 2)     # keep >= 2 grid steps for megacore sharding
    nb = 1
    for d in range(1, min(cap, N) + 1):
        if N % d == 0:             # divisor of N -> no batch padding needed
            nb = d
    return nb


def cbam_kernel(x_ref, w_ca_ref, b_ca_ref, t_ref, o_ref, *, NB, H, W, HW, HW_pad, HP):
    x_dtype = x_ref.dtype
    C = x_ref.shape[1]
    inv_hw = jnp.float32(1.0 / HW)
    inv_c = jnp.float32(1.0 / C)

    # Hoisted broadcast constants (JAX does not CSE broadcasts inside the unrolled loop).
    ones_hw = jnp.ones((HW_pad, 1), x_dtype)   # lane-sum  -> MXU matvec
    ones_c = jnp.ones((1, C), x_dtype)         # sublane-sum -> MXU matvec

    for n in range(NB):                        # static unroll over the batch block
        xn = x_ref[n]                          # (C, HW_pad), kept in the input dtype

        # ---------------- channel attention ----------------
        # Global average pool as an MXU matvec (f32 accumulation), 1x1 conv as an
        # MXU matvec, sigmoid on the EUP.
        pooled = jnp.dot(xn, ones_hw, preferred_element_type=jnp.float32) * inv_hw  # (C,1)
        logits = jnp.dot(w_ca_ref[...], pooled,
                         preferred_element_type=jnp.float32) + b_ca_ref[...]        # (C,1)
        a_c = jax.nn.sigmoid(logits)                                                 # (C,1) f32
        a_cx = a_c.astype(x_dtype)

        # ---------------- spatial-attention statistics ----------------
        # y = x * a_c is only a transient in the input dtype; its channel mean is
        # reduced on the MXU, the channel max on the VPU/XLU.
        yn = xn * a_cx                                                               # (C, HW_pad)
        mean_c = jnp.dot(ones_c, yn, preferred_element_type=jnp.float32) * inv_c    # (1, HW_pad) f32
        max_c = jnp.max(yn, axis=0, keepdims=True).astype(jnp.float32)              # (1, HW_pad) f32

        # ---------------- 7x7 spatial conv ----------------
        # kx (lane) dimension folded into banded Toeplitz matmuls; only the ky
        # dimension remains as 7 sublane-window slices of the padded planes.
        pm = _pad_rows(_rows_to_plane(mean_c, H, W), HP)        # (HP, W) f32
        px = _pad_rows(_rows_to_plane(max_c, H, W), HP)         # (HP, W) f32
        planes = jnp.concatenate([pm, px], axis=1)              # (HP, 2W)
        acc0 = jnp.zeros((H, W), jnp.float32)                   # two accumulators break
        acc1 = jnp.zeros((H, W), jnp.float32)                   # the serial add chain
        for ky in range(KSIZE):
            contrib = jnp.dot(planes[ky:ky + H, :], t_ref[ky],
                              preferred_element_type=jnp.float32)
            if ky % 2 == 0:
                acc0 = acc0 + contrib
            else:
                acc1 = acc1 + contrib
        attn_s = jax.nn.sigmoid(acc0 + acc1)                    # (H, W) f32

        # Back to the lane-dense flat layout for the fused final scale + dense store.
        attn_row = _plane_to_row(attn_s, H, W)                  # (1, H*W) f32
        if HW_pad > HW:
            attn_row = jnp.concatenate(
                [attn_row, jnp.zeros((1, HW_pad - HW), jnp.float32)], axis=1)

        o_ref[n] = (xn * a_cx) * attn_row.astype(x_dtype)


def cbam(x, w_ca, b_ca, w_sa):
    """x: (N, C, H, W); w_ca: (C, C, 1, 1); b_ca: (C,); w_sa: (1, 2, 7, 7)."""
    N, C, H, W = x.shape
    HW = H * W
    HW_pad = _round_up(HW, 128)             # lane-dense AND lane-aligned bulk layout
    HP = _round_up(H + 2 * PAD, 8)
    itemsize = jnp.dtype(x.dtype).itemsize

    x_flat = x.reshape(N, C, HW)            # free: contiguous NCHW view
    if HW_pad != HW:
        x_flat = jnp.pad(x_flat, ((0, 0), (0, 0), (0, HW_pad - HW)))

    per_sample_io = 2 * C * HW_pad * itemsize        # one read + one write per sample
    NB = _choose_nb(N, per_sample_io)

    # Static VMEM fit check (double-buffered in/out + weights + conv constants + temps).
    vmem_est = (2 * NB * per_sample_io               # in + out, double-buffered
                + 2 * (C * C + C) * 4                # w_ca + b_ca (double-buffered)
                + 2 * KSIZE * 2 * W * W * 4          # Toeplitz conv matrices
                + 2 * NB * C * HW_pad * 4)           # transient elementwise temps
    assert vmem_est <= VMEM_LIMIT_BYTES, (
        f"CBAM block does not fit scoped VMEM: {vmem_est} > {VMEM_LIMIT_BYTES}")

    w_ca2 = w_ca.reshape(C, C).astype(jnp.float32)   # [out, in]
    b_ca2 = b_ca.reshape(C, 1).astype(jnp.float32)
    t_conv = _build_toeplitz(w_sa, W)                # (KSIZE, 2W, W) f32 constant

    kernel = functools.partial(cbam_kernel, NB=NB, H=H, W=W,
                               HW=HW, HW_pad=HW_pad, HP=HP)

    out_flat = pl.pallas_call(
        kernel,
        out_shape=jax.ShapeDtypeStruct((N, C, HW_pad), x.dtype),
        grid=(N // NB,),
        in_specs=[
            pl.BlockSpec((NB, C, HW_pad), lambda n: (n, 0, 0)),
            # Constant-index weight blocks (never re-DMA'd across the grid).
            pl.BlockSpec((C, C), lambda n: (0, 0)),
            pl.BlockSpec((C, 1), lambda n: (0, 0)),
            pl.BlockSpec((KSIZE, 2 * W, W), lambda n: (0, 0, 0)),
        ],
        out_specs=pl.BlockSpec((NB, C, HW_pad), lambda n: (n, 0, 0)),
        compiler_params=pltpu.CompilerParams(
            dimension_semantics=("parallel",),
            vmem_limit_bytes=VMEM_LIMIT_BYTES,
        ),
    )(x_flat, w_ca2, b_ca2, t_conv)

    if HW_pad != HW:
        out_flat = out_flat[:, :, :HW]
    return out_flat.reshape(N, C, H, W)


def cbam_ref(x, w_ca, b_ca, w_sa):
    """Pure-JAX reference matching the PyTorch forward semantics (NCHW)."""
    pooled = jnp.mean(x, axis=(2, 3), keepdims=True)                       # (N,C,1,1)
    logits = lax.conv_general_dilated(
        pooled, w_ca, (1, 1), 'VALID',
        dimension_numbers=('NCHW', 'OIHW', 'NCHW')) + b_ca.reshape(1, -1, 1, 1)
    y = x * jax.nn.sigmoid(logits)
    s_in = jnp.concatenate(
        [jnp.mean(y, axis=1, keepdims=True), jnp.max(y, axis=1, keepdims=True)], axis=1)
    conv = lax.conv_general_dilated(
        s_in, w_sa, (1, 1), [(PAD, PAD), (PAD, PAD)],
        dimension_numbers=('NCHW', 'OIHW', 'NCHW'))
    return y * jax.nn.sigmoid(conv)


if __name__ == "__main__":
    key = jax.random.PRNGKey(0)
    N, C, H, W = 2, 4, 16, 16
    k1, k2, k3, k4 = jax.random.split(key, 4)

    x = jax.random.normal(k1, (N, C, H, W), jnp.float32)

    # Deterministic synthetic parameters (shapes match the PyTorch module __init__).
    bound_ca = 1.0 / np.sqrt(C * 1 * 1)
    w_ca = jax.random.uniform(k2, (C, C, 1, 1), jnp.float32, -bound_ca, bound_ca)
    b_ca = jax.random.uniform(k3, (C,), jnp.float32, -bound_ca, bound_ca)
    bound_sa = 1.0 / np.sqrt(2 * KSIZE * KSIZE)
    w_sa = jax.random.uniform(k4, (1, 2, KSIZE, KSIZE), jnp.float32, -bound_sa, bound_sa)

    out = jax.block_until_ready(cbam(x, w_ca, b_ca, w_sa))
    ref = jax.block_until_ready(cbam_ref(x, w_ca, b_ca, w_sa))

    np.testing.assert_allclose(np.asarray(out), np.asarray(ref), rtol=1e-4, atol=1e-5)
    print("KERNEL_OK")
</pallas_src>

<mosaic_0001>
module attributes {stable_mosaic.version = 11 : i64} {
  func.func @cbam_kernel(%arg0: i32, %arg1: memref<1x4x256xf32, #tpu.memory_space<vmem>>, %arg2: memref<4x4xf32, #tpu.memory_space<vmem>>, %arg3: memref<4x1xf32, #tpu.memory_space<vmem>>, %arg4: memref<7x32x16xf32, #tpu.memory_space<vmem>>, %arg5: memref<1x4x256xf32, #tpu.memory_space<vmem>>) attributes {dimension_semantics = [#tpu.dimension_semantics<parallel>], iteration_bounds = array<i64: 2>, scalar_prefetch = 0 : i64, scratch_operands = 0 : i64, tpu.core_type = #tpu.core_type<tc>, window_params = [{transform_indices = @transform_0, window_bounds = array<i64: 1, 4, 256>}, {pipeline_mode = #tpu.pipeline_mode<synchronous>, transform_indices = @transform_1, window_bounds = array<i64: 4, 4>}, {pipeline_mode = #tpu.pipeline_mode<synchronous>, transform_indices = @transform_2, window_bounds = array<i64: 4, 1>}, {pipeline_mode = #tpu.pipeline_mode<synchronous>, transform_indices = @transform_3, window_bounds = array<i64: 7, 32, 16>}, {transform_indices = @transform_4, window_bounds = array<i64: 1, 4, 256>}]} {
    %cst = arith.constant 1.000000e+00 : f32
    %0 = vector.broadcast %cst : f32 to vector<256x1xf32>
    %cst_0 = arith.constant 1.000000e+00 : f32
    %1 = vector.broadcast %cst_0 : f32 to vector<1x4xf32>
    %c0 = arith.constant 0 : index
    %c0_1 = arith.constant 0 : index
    %c0_2 = arith.constant 0 : index
    %2 = vector.load %arg1[%c0, %c0_1, %c0_2] : memref<1x4x256xf32, #tpu.memory_space<vmem>>, vector<1x4x256xf32>
    %3 = vector.shape_cast %2 : vector<1x4x256xf32> to vector<4x256xf32>
    %cst_3 = arith.constant dense<0.000000e+00> : vector<4x1xf32>
    %4 = tpu.matmul %3, %0, %cst_3 {dimension_numbers = #tpu.dot_dimension_numbers<[1], [0], [0], [1], [0, 0, 1, 1], [], []>} : vector<4x256xf32>, vector<256x1xf32>, vector<4x1xf32> -> vector<4x1xf32>
    %cst_4 = arith.constant 3.906250e-03 : f32
    %5 = vector.broadcast %cst_4 : f32 to vector<4x1xf32>
    %6 = arith.mulf %4, %5 : vector<4x1xf32>
    %c0_5 = arith.constant 0 : index
    %c0_6 = arith.constant 0 : index
    %7 = vector.load %arg2[%c0_5, %c0_6] : memref<4x4xf32, #tpu.memory_space<vmem>>, vector<4x4xf32>
    %cst_7 = arith.constant dense<0.000000e+00> : vector<4x1xf32>
    %8 = tpu.matmul %7, %6, %cst_7 {dimension_numbers = #tpu.dot_dimension_numbers<[1], [0], [0], [1], [0, 0, 1, 1], [], []>} : vector<4x4xf32>, vector<4x1xf32>, vector<4x1xf32> -> vector<4x1xf32>
    %c0_8 = arith.constant 0 : index
    %c0_9 = arith.constant 0 : index
    %9 = vector.load %arg3[%c0_8, %c0_9] : memref<4x1xf32, #tpu.memory_space<vmem>>, vector<4x1xf32>
    %10 = arith.addf %8, %9 : vector<4x1xf32>
    %11 = arith.negf %10 : vector<4x1xf32>
    %12 = math.exp %11 : vector<4x1xf32>
    %cst_10 = arith.constant 1.000000e+00 : f32
    %13 = vector.broadcast %cst_10 : f32 to vector<4x1xf32>
    %14 = arith.addf %13, %12 : vector<4x1xf32>
    %15 = arith.divf %13, %14 : vector<4x1xf32>
    %16 = vector.broadcast %15 : vector<4x1xf32> to vector<4x256xf32>
    %17 = arith.mulf %3, %16 : vector<4x256xf32>
    %cst_11 = arith.constant dense<0.000000e+00> : vector<1x256xf32>
    %18 = tpu.matmul %1, %17, %cst_11 {dimension_numbers = #tpu.dot_dimension_numbers<[1], [0], [0], [1], [0, 0, 1, 1], [], []>} : vector<1x4xf32>, vector<4x256xf32>, vector<1x256xf32> -> vector<1x256xf32>
    %cst_12 = arith.constant 2.500000e-01 : f32
    %19 = vector.broadcast %cst_12 : f32 to vector<1x256xf32>
    %20 = arith.mulf %18, %19 : vector<1x256xf32>
    %cst_13 = arith.constant dense<0xFF800000> : vector<256xf32>
    %21 = vector.multi_reduction <maximumf>, %17, %cst_13 [0] : vector<4x256xf32> to vector<256xf32>
    %22 = vector.shape_cast %21 : vector<256xf32> to vector<1x256xf32>
    %23 = vector.extract_strided_slice %20 {offsets = [0, 0], sizes = [1, 16], strides = [1, 1]} : vector<1x256xf32> to vector<1x16xf32>
    %24 = vector.extract_strided_slice %20 {offsets = [0, 16], sizes = [1, 16], strides = [1, 1]} : vector<1x256xf32> to vector<1x16xf32>
    %25 = vector.extract_strided_slice %20 {offsets = [0, 32], sizes = [1, 16], strides = [1, 1]} : vector<1x256xf32> to vector<1x16xf32>
    %26 = vector.extract_strided_slice %20 {offsets = [0, 48], sizes = [1, 16], strides = [1, 1]} : vector<1x256xf32> to vector<1x16xf32>
    %27 = vector.extract_strided_slice %20 {offsets = [0, 64], sizes = [1, 16], strides = [1, 1]} : vector<1x256xf32> to vector<1x16xf32>
    %28 = vector.extract_strided_slice %20 {offsets = [0, 80], sizes = [1, 16], strides = [1, 1]} : vector<1x256xf32> to vector<1x16xf32>
    %29 = vector.extract_strided_slice %20 {offsets = [0, 96], sizes = [1, 16], strides = [1, 1]} : vector<1x256xf32> to vector<1x16xf32>
    %30 = vector.extract_strided_slice %20 {offsets = [0, 112], sizes = [1, 16], strides = [1, 1]} : vector<1x256xf32> to vector<1x16xf32>
    %31 = vector.extract_strided_slice %20 {offsets = [0, 128], sizes = [1, 16], strides = [1, 1]} : vector<1x256xf32> to vector<1x16xf32>
    %32 = vector.extract_strided_slice %20 {offsets = [0, 144], sizes = [1, 16], strides = [1, 1]} : vector<1x256xf32> to vector<1x16xf32>
    %33 = vector.extract_strided_slice %20 {offsets = [0, 160], sizes = [1, 16], strides = [1, 1]} : vector<1x256xf32> to vector<1x16xf32>
    %34 = vector.extract_strided_slice %20 {offsets = [0, 176], sizes = [1, 16], strides = [1, 1]} : vector<1x256xf32> to vector<1x16xf32>
    %35 = vector.extract_strided_slice %20 {offsets = [0, 192], sizes = [1, 16], strides = [1, 1]} : vector<1x256xf32> to vector<1x16xf32>
    %36 = vector.extract_strided_slice %20 {offsets = [0, 208], sizes = [1, 16], strides = [1, 1]} : vector<1x256xf32> to vector<1x16xf32>
    %37 = vector.extract_strided_slice %20 {offsets = [0, 224], sizes = [1, 16], strides = [1, 1]} : vector<1x256xf32> to vector<1x16xf32>
    %38 = vector.extract_strided_slice %20 {offsets = [0, 240], sizes = [1, 16], strides = [1, 1]} : vector<1x256xf32> to vector<1x16xf32>
    %39 = tpu.concatenate %23, %24, %25, %26, %27, %28, %29, %30, %31, %32, %33, %34, %35, %36, %37, %38 in 0 : vector<1x16xf32>, vector<1x16xf32>, vector<1x16xf32>, vector<1x16xf32>, vector<1x16xf32>, vector<1x16xf32>, vector<1x16xf32>, vector<1x16xf32>, vector<1x16xf32>, vector<1x16xf32>, vector<1x16xf32>, vector<1x16xf32>, vector<1x16xf32>, vector<1x16xf32>, vector<1x16xf32>, vector<1x16xf32> -> vector<16x16xf32>
    %cst_14 = arith.constant 0.000000e+00 : f32
    %40 = vector.broadcast %cst_14 : f32 to vector<3x16xf32>
    %cst_15 = arith.constant 0.000000e+00 : f32
    %41 = vector.broadcast %cst_15 : f32 to vector<5x16xf32>
    %42 = tpu.concatenate %40, %39, %41 in 0 : vector<3x16xf32>, vector<16x16xf32>, vector<5x16xf32> -> vector<24x16xf32>
    %43 = vector.extract_strided_slice %22 {offsets = [0, 0], sizes = [1, 16], strides = [1, 1]} : vector<1x256xf32> to vector<1x16xf32>
    %44 = vector.extract_strided_slice %22 {offsets = [0, 16], sizes = [1, 16], strides = [1, 1]} : vector<1x256xf32> to vector<1x16xf32>
    %45 = vector.extract_strided_slice %22 {offsets = [0, 32], sizes = [1, 16], strides = [1, 1]} : vector<1x256xf32> to vector<1x16xf32>
    %46 = vector.extract_strided_slice %22 {offsets = [0, 48], sizes = [1, 16], strides = [1, 1]} : vector<1x256xf32> to vector<1x16xf32>
    %47 = vector.extract_strided_slice %22 {offsets = [0, 64], sizes = [1, 16], strides = [1, 1]} : vector<1x256xf32> to vector<1x16xf32>
    %48 = vector.extract_strided_slice %22 {offsets = [0, 80], sizes = [1, 16], strides = [1, 1]} : vector<1x256xf32> to vector<1x16xf32>
    %49 = vector.extract_strided_slice %22 {offsets = [0, 96], sizes = [1, 16], strides = [1, 1]} : vector<1x256xf32> to vector<1x16xf32>
    %50 = vector.extract_strided_slice %22 {offsets = [0, 112], sizes = [1, 16], strides = [1, 1]} : vector<1x256xf32> to vector<1x16xf32>
    %51 = vector.extract_strided_slice %22 {offsets = [0, 128], sizes = [1, 16], strides = [1, 1]} : vector<1x256xf32> to vector<1x16xf32>
    %52 = vector.extract_strided_slice %22 {offsets = [0, 144], sizes = [1, 16], strides = [1, 1]} : vector<1x256xf32> to vector<1x16xf32>
    %53 = vector.extract_strided_slice %22 {offsets = [0, 160], sizes = [1, 16], strides = [1, 1]} : vector<1x256xf32> to vector<1x16xf32>
    %54 = vector.extract_strided_slice %22 {offsets = [0, 176], sizes = [1, 16], strides = [1, 1]} : vector<1x256xf32> to vector<1x16xf32>
    %55 = vector.extract_strided_slice %22 {offsets = [0, 192], sizes = [1, 16], strides = [1, 1]} : vector<1x256xf32> to vector<1x16xf32>
    %56 = vector.extract_strided_slice %22 {offsets = [0, 208], sizes = [1, 16], strides = [1, 1]} : vector<1x256xf32> to vector<1x16xf32>
    %57 = vector.extract_strided_slice %22 {offsets = [0, 224], sizes = [1, 16], strides = [1, 1]} : vector<1x256xf32> to vector<1x16xf32>
    %58 = vector.extract_strided_slice %22 {offsets = [0, 240], sizes = [1, 16], strides = [1, 1]} : vector<1x256xf32> to vector<1x16xf32>
    %59 = tpu.concatenate %43, %44, %45, %46, %47, %48, %49, %50, %51, %52, %53, %54, %55, %56, %57, %58 in 0 : vector<1x16xf32>, vector<1x16xf32>, vector<1x16xf32>, vector<1x16xf32>, vector<1x16xf32>, vector<1x16xf32>, vector<1x16xf32>, vector<1x16xf32>, vector<1x16xf32>, vector<1x16xf32>, vector<1x16xf32>, vector<1x16xf32>, vector<1x16xf32>, vector<1x16xf32>, vector<1x16xf32>, vector<1x16xf32> -> vector<16x16xf32>
    %cst_16 = arith.constant 0.000000e+00 : f32
    %60 = vector.broadcast %cst_16 : f32 to vector<3x16xf32>
    %cst_17 = arith.constant 0.000000e+00 : f32
    %61 = vector.broadcast %cst_17 : f32 to vector<5x16xf32>
    %62 = tpu.concatenate %60, %59, %61 in 0 : vector<3x16xf32>, vector<16x16xf32>, vector<5x16xf32> -> vector<24x16xf32>
    %63 = tpu.concatenate %42, %62 in 1 : vector<24x16xf32>, vector<24x16xf32> -> vector<24x32xf32>
    %cst_18 = arith.constant 0.000000e+00 : f32
    %64 = vector.broadcast %cst_18 : f32 to vector<16x16xf32>
    %cst_19 = arith.constant 0.000000e+00 : f32
    %65 = vector.broadcast %cst_19 : f32 to vector<16x16xf32>
    %66 = vector.extract_strided_slice %63 {offsets = [0, 0], sizes = [16, 32], strides = [1, 1]} : vector<24x32xf32> to vector<16x32xf32>
    %c0_20 = arith.constant 0 : index
    %c0_21 = arith.constant 0 : index
    %c0_22 = arith.constant 0 : index
    %67 = vector.load %arg4[%c0_20, %c0_21, %c0_22] : memref<7x32x16xf32, #tpu.memory_space<vmem>>, vector<1x32x16xf32>
    %68 = vector.shape_cast %67 : vector<1x32x16xf32> to vector<32x16xf32>
    %cst_23 = arith.constant dense<0.000000e+00> : vector<16x16xf32>
    %69 = tpu.matmul %66, %68, %cst_23 {dimension_numbers = #tpu.dot_dimension_numbers<[1], [0], [0], [1], [0, 0, 1, 1], [], []>} : vector<16x32xf32>, vector<32x16xf32>, vector<16x16xf32> -> vector<16x16xf32>
    %70 = arith.addf %64, %69 : vector<16x16xf32>
    %71 = vector.extract_strided_slice %63 {offsets = [1, 0], sizes = [16, 32], strides = [1, 1]} : vector<24x32xf32> to vector<16x32xf32>
    %c1 = arith.constant 1 : index
    %c0_24 = arith.constant 0 : index
    %c0_25 = arith.constant 0 : index
    %72 = vector.load %arg4[%c1, %c0_24, %c0_25] : memref<7x32x16xf32, #tpu.memory_space<vmem>>, vector<1x32x16xf32>
    %73 = vector.shape_cast %72 : vector<1x32x16xf32> to vector<32x16xf32>
    %cst_26 = arith.constant dense<0.000000e+00> : vector<16x16xf32>
    %74 = tpu.matmul %71, %73, %cst_26 {dimension_numbers = #tpu.dot_dimension_numbers<[1], [0], [0], [1], [0, 0, 1, 1], [], []>} : vector<16x32xf32>, vector<32x16xf32>, vector<16x16xf32> -> vector<16x16xf32>
    %75 = arith.addf %65, %74 : vector<16x16xf32>
    %76 = vector.extract_strided_slice %63 {offsets = [2, 0], sizes = [16, 32], strides = [1, 1]} : vector<24x32xf32> to vector<16x32xf32>
    %c2 = arith.constant 2 : index
    %c0_27 = arith.constant 0 : index
    %c0_28 = arith.constant 0 : index
    %77 = vector.load %arg4[%c2, %c0_27, %c0_28] : memref<7x32x16xf32, #tpu.memory_space<vmem>>, vector<1x32x16xf32>
    %78 = vector.shape_cast %77 : vector<1x32x16xf32> to vector<32x16xf32>
    %cst_29 = arith.constant dense<0.000000e+00> : vector<16x16xf32>
    %79 = tpu.matmul %76, %78, %cst_29 {dimension_numbers = #tpu.dot_dimension_numbers<[1], [0], [0], [1], [0, 0, 1, 1], [], []>} : vector<16x32xf32>, vector<32x16xf32>, vector<16x16xf32> -> vector<16x16xf32>
    %80 = arith.addf %70, %79 : vector<16x16xf32>
    %81 = vector.extract_strided_slice %63 {offsets = [3, 0], sizes = [16, 32], strides = [1, 1]} : vector<24x32xf32> to vector<16x32xf32>
    %c3 = arith.constant 3 : index
    %c0_30 = arith.constant 0 : index
    %c0_31 = arith.constant 0 : index
    %82 = vector.load %arg4[%c3, %c0_30, %c0_31] : memref<7x32x16xf32, #tpu.memory_space<vmem>>, vector<1x32x16xf32>
    %83 = vector.shape_cast %82 : vector<1x32x16xf32> to vector<32x16xf32>
    %cst_32 = arith.constant dense<0.000000e+00> : vector<16x16xf32>
    %84 = tpu.matmul %81, %83, %cst_32 {dimension_numbers = #tpu.dot_dimension_numbers<[1], [0], [0], [1], [0, 0, 1, 1], [], []>} : vector<16x32xf32>, vector<32x16xf32>, vector<16x16xf32> -> vector<16x16xf32>
    %85 = arith.addf %75, %84 : vector<16x16xf32>
    %86 = vector.extract_strided_slice %63 {offsets = [4, 0], sizes = [16, 32], strides = [1, 1]} : vector<24x32xf32> to vector<16x32xf32>
    %c4 = arith.constant 4 : index
    %c0_33 = arith.constant 0 : index
    %c0_34 = arith.constant 0 : index
    %87 = vector.load %arg4[%c4, %c0_33, %c0_34] : memref<7x32x16xf32, #tpu.memory_space<vmem>>, vector<1x32x16xf32>
    %88 = vector.shape_cast %87 : vector<1x32x16xf32> to vector<32x16xf32>
    %cst_35 = arith.constant dense<0.000000e+00> : vector<16x16xf32>
    %89 = tpu.matmul %86, %88, %cst_35 {dimension_numbers = #tpu.dot_dimension_numbers<[1], [0], [0], [1], [0, 0, 1, 1], [], []>} : vector<16x32xf32>, vector<32x16xf32>, vector<16x16xf32> -> vector<16x16xf32>
    %90 = arith.addf %80, %89 : vector<16x16xf32>
    %91 = vector.extract_strided_slice %63 {offsets = [5, 0], sizes = [16, 32], strides = [1, 1]} : vector<24x32xf32> to vector<16x32xf32>
    %c5 = arith.constant 5 : index
    %c0_36 = arith.constant 0 : index
    %c0_37 = arith.constant 0 : index
    %92 = vector.load %arg4[%c5, %c0_36, %c0_37] : memref<7x32x16xf32, #tpu.memory_space<vmem>>, vector<1x32x16xf32>
    %93 = vector.shape_cast %92 : vector<1x32x16xf32> to vector<32x16xf32>
    %cst_38 = arith.constant dense<0.000000e+00> : vector<16x16xf32>
    %94 = tpu.matmul %91, %93, %cst_38 {dimension_numbers = #tpu.dot_dimension_numbers<[1], [0], [0], [1], [0, 0, 1, 1], [], []>} : vector<16x32xf32>, vector<32x16xf32>, vector<16x16xf32> -> vector<16x16xf32>
    %95 = arith.addf %85, %94 : vector<16x16xf32>
    %96 = vector.extract_strided_slice %63 {offsets = [6, 0], sizes = [16, 32], strides = [1, 1]} : vector<24x32xf32> to vector<16x32xf32>
    %c6 = arith.constant 6 : index
    %c0_39 = arith.constant 0 : index
    %c0_40 = arith.constant 0 : index
    %97 = vector.load %arg4[%c6, %c0_39, %c0_40] : memref<7x32x16xf32, #tpu.memory_space<vmem>>, vector<1x32x16xf32>
    %98 = vector.shape_cast %97 : vector<1x32x16xf32> to vector<32x16xf32>
    %cst_41 = arith.constant dense<0.000000e+00> : vector<16x16xf32>
    %99 = tpu.matmul %96, %98, %cst_41 {dimension_numbers = #tpu.dot_dimension_numbers<[1], [0], [0], [1], [0, 0, 1, 1], [], []>} : vector<16x32xf32>, vector<32x16xf32>, vector<16x16xf32> -> vector<16x16xf32>
    %100 = arith.addf %90, %99 : vector<16x16xf32>
    %101 = arith.addf %100, %95 : vector<16x16xf32>
    %102 = arith.negf %101 : vector<16x16xf32>
    %103 = math.exp %102 : vector<16x16xf32>
    %cst_42 = arith.constant 1.000000e+00 : f32
    %104 = vector.broadcast %cst_42 : f32 to vector<16x16xf32>
    %105 = arith.addf %104, %103 : vector<16x16xf32>
    %106 = arith.divf %104, %105 : vector<16x16xf32>
    %107 = vector.extract_strided_slice %106 {offsets = [0, 0], sizes = [1, 16], strides = [1, 1]} : vector<16x16xf32> to vector<1x16xf32>
    %108 = vector.extract_strided_slice %106 {offsets = [1, 0], sizes = [1, 16], strides = [1, 1]} : vector<16x16xf32> to vector<1x16xf32>
    %109 = vector.extract_strided_slice %106 {offsets = [2, 0], sizes = [1, 16], strides = [1, 1]} : vector<16x16xf32> to vector<1x16xf32>
    %110 = vector.extract_strided_slice %106 {offsets = [3, 0], sizes = [1, 16], strides = [1, 1]} : vector<16x16xf32> to vector<1x16xf32>
    %111 = vector.extract_strided_slice %106 {offsets = [4, 0], sizes = [1, 16], strides = [1, 1]} : vector<16x16xf32> to vector<1x16xf32>
    %112 = vector.extract_strided_slice %106 {offsets = [5, 0], sizes = [1, 16], strides = [1, 1]} : vector<16x16xf32> to vector<1x16xf32>
    %113 = vector.extract_strided_slice %106 {offsets = [6, 0], sizes = [1, 16], strides = [1, 1]} : vector<16x16xf32> to vector<1x16xf32>
    %114 = vector.extract_strided_slice %106 {offsets = [7, 0], sizes = [1, 16], strides = [1, 1]} : vector<16x16xf32> to vector<1x16xf32>
    %115 = vector.extract_strided_slice %106 {offsets = [8, 0], sizes = [1, 16], strides = [1, 1]} : vector<16x16xf32> to vector<1x16xf32>
    %116 = vector.extract_strided_slice %106 {offsets = [9, 0], sizes = [1, 16], strides = [1, 1]} : vector<16x16xf32> to vector<1x16xf32>
    %117 = vector.extract_strided_slice %106 {offsets = [10, 0], sizes = [1, 16], strides = [1, 1]} : vector<16x16xf32> to vector<1x16xf32>
    %118 = vector.extract_strided_slice %106 {offsets = [11, 0], sizes = [1, 16], strides = [1, 1]} : vector<16x16xf32> to vector<1x16xf32>
    %119 = vector.extract_strided_slice %106 {offsets = [12, 0], sizes = [1, 16], strides = [1, 1]} : vector<16x16xf32> to vector<1x16xf32>
    %120 = vector.extract_strided_slice %106 {offsets = [13, 0], sizes = [1, 16], strides = [1, 1]} : vector<16x16xf32> to vector<1x16xf32>
    %121 = vector.extract_strided_slice %106 {offsets = [14, 0], sizes = [1, 16], strides = [1, 1]} : vector<16x16xf32> to vector<1x16xf32>
    %122 = vector.extract_strided_slice %106 {offsets = [15, 0], sizes = [1, 16], strides = [1, 1]} : vector<16x16xf32> to vector<1x16xf32>
    %123 = tpu.concatenate %107, %108, %109, %110, %111, %112, %113, %114, %115, %116, %117, %118, %119, %120, %121, %122 in 1 : vector<1x16xf32>, vector<1x16xf32>, vector<1x16xf32>, vector<1x16xf32>, vector<1x16xf32>, vector<1x16xf32>, vector<1x16xf32>, vector<1x16xf32>, vector<1x16xf32>, vector<1x16xf32>, vector<1x16xf32>, vector<1x16xf32>, vector<1x16xf32>, vector<1x16xf32>, vector<1x16xf32>, vector<1x16xf32> -> vector<1x256xf32>
    %124 = vector.broadcast %15 : vector<4x1xf32> to vector<4x256xf32>
    %125 = arith.mulf %3, %124 : vector<4x256xf32>
    %126 = vector.broadcast %123 : vector<1x256xf32> to vector<4x256xf32>
    %127 = arith.mulf %125, %126 : vector<4x256xf32>
    %c0_43 = arith.constant 0 : index
    %c0_44 = arith.constant 0 : index
    %c0_45 = arith.constant 0 : index
    %128 = vector.load %arg5[%c0_43, %c0_44, %c0_45] : memref<1x4x256xf32, #tpu.memory_space<vmem>>, vector<1x4x256xf32>
    %129 = vector.shape_cast %128 : vector<1x4x256xf32> to vector<4x256xf32>
    %130 = vector.shape_cast %127 : vector<4x256xf32> to vector<1x4x256xf32>
    tpu.vector_store %arg5[%c0_43, %c0_44, %c0_45], %130 {strides = array<i32>} : memref<1x4x256xf32, #tpu.memory_space<vmem>>, vector<1x4x256xf32>,
    return
  }
  func.func @transform_0(%arg0: i32) -> (i32, i32, i32) {
    %c0_i32 = arith.constant 0 : i32
    %c0_i32_0 = arith.constant 0 : i32
    %c0_i32_1 = arith.constant 0 : i32
    return %arg0, %c0_i32, %c0_i32_0 : i32, i32, i32
  }
  func.func @transform_1(%arg0: i32) -> (i32, i32) {
    %c0_i32 = arith.constant 0 : i32
    %c0_i32_0 = arith.constant 0 : i32
    %c0_i32_1 = arith.constant 0 : i32
    return %c0_i32, %c0_i32_0 : i32, i32
  }
  func.func @transform_2(%arg0: i32) -> (i32, i32) {
    %c0_i32 = arith.constant 0 : i32
    %c0_i32_0 = arith.constant 0 : i32
    %c0_i32_1 = arith.constant 0 : i32
    return %c0_i32, %c0_i32_0 : i32, i32
  }
  func.func @transform_3(%arg0: i32) -> (i32, i32, i32) {
    %c0_i32 = arith.constant 0 : i32
    %c0_i32_0 = arith.constant 0 : i32
    %c0_i32_1 = arith.constant 0 : i32
    %c0_i32_2 = arith.constant 0 : i32
    return %c0_i32, %c0_i32_0, %c0_i32_1 : i32, i32, i32
  }
  func.func @transform_4(%arg0: i32) -> (i32, i32, i32) {
    %c0_i32 = arith.constant 0 : i32
    %c0_i32_0 = arith.constant 0 : i32
    %c0_i32_1 = arith.constant 0 : i32
    return %arg0, %c0_i32, %c0_i32_0 : i32, i32, i32
  }
}

</mosaic_0001>

<llo_original>
// kernel: tpu_custom_call.1
$region0: #{tpu_custom_call.1}
  #allocation0 [shape = 'u32[]', space=smem, size = 0x4, offset = 0x4, fixed_abs, tag = 'smem constant byte address 0x4 - core index']
  #allocation1 [shape = 'u32[144,128]{1,0:T(1,128)}', space=vmem, size = 0x12000, scoped, tag = 'internal scratch']
  %s0 = inlined_call_operand.vmem [shape: f32[2,4,256], index: 0, kind: input, shape index: {}]
  %s1 = inlined_call_operand.vmem [shape: f32[4,4], index: 1, kind: input, shape index: {}]
  %s2 = inlined_call_operand.vmem [shape: f32[4,1], index: 2, kind: input, shape index: {}]
  %s3 = inlined_call_operand.vmem [shape: f32[7,32,16], index: 3, kind: input, shape index: {}]
  %s4 = inlined_call_operand.hbm [shape: f32[2,4,256], index: 4, kind: output, shape index: {}]
  %s5 = sld [smem:[#allocation0]]
  $region49: #{tpu_custom_call.1} parent=0
    _
  %s7 = ssub.s32 1, %s5
  %s8 = scalar_select 0, %s7, %s5
  $region1: #{tpu_custom_call.1} parent=0
    #allocation2 [shape = 'u8[8192]{0}', space=vmem, size = 0x2000, scoped, tag = 'output window, operand 0']
    #allocation3 [shape = 's32[2]{0}', space=sflag, size = 0x8, scoped, tag = 'scoped memory for tpu_custom_call.1']
    %9 = vsyncpa [#allocation3], 0
    %s10 = scalar_lea.sflag [#allocation3], 1
    %11 = vsyncpa %s10, 0
    loop: start=0, step=1, limit=4
    $region2: #{tpu_custom_call.1} parent=1 // loop_pre_header
      _
    $region3: #{tpu_custom_call.1} parent=1 // loop_header
      %s13 = sphi 0, %s17
      %p14 = scmp.ge.s32.totalorder %s13, 4
      %s23 = sphi 0, %s25
      %s26 = sphi 0, %s23
      %s27 = sphi 0, %s26
      %s43 = sphi 0, %s27
      %s47 = sphi 0, %s47
      %s49 = sphi 0, %s47
      %s50 = sphi 0, %s49
      %s64 = sphi 0, %s50
      %s68 = sphi 0, %s68
      %s70 = sphi 0, %s68
      %s71 = sphi 0, %s70
      %s85 = sphi 0, %s71
      %s89 = sphi 0, %s89
      %s91 = sphi 0, %s89
      %s92 = sphi 0, %s91
      %s106 = sphi 0, %s92
      %s112 = sphi 0, %s114
      %s115 = sphi 0, %s112
      %s116 = sphi 0, %s115
      %s132 = sphi 0, %s116
    $region4: #{tpu_custom_call.1} parent=1 // loop_header_branch
      %16 = sbr.rel (%p14) target = $region8
    $region5: #{tpu_custom_call.1} parent=1 // loop_body
      %s18 = ssub.s32 %s13, 1
      %s19 = ssub.s32 %s13, 2
      %s20 = sadd.s32 %s13, 1
      %s21 = ssub.s32 %s13, %s20
      %p22 = scmp.eq.s32.totalorder %s21, 0
      %s24 = sadd.s32 %s23, 1
      %s25 = scalar_select %p22, %s23, %s24
      %p28 = pneg %p22
      %p29 = scmp.eq.s32.totalorder %s13, 1
      %p30 = por %p28, %p29
      %p31 = scmp.ne.s32.totalorder %s23, %s26
      %p32 = scmp.eq.s32.totalorder %s13, 0
      %p33 = por %p31, %p32
      %p34 = scmp.ne.s32.totalorder %s23, %s26
      %p35 = scmp.eq.s32.totalorder %s18, 1
      %p36 = por %p34, %p35
      %p37 = scmp.ne.s32.totalorder %s26, %s27
      %p38 = scmp.eq.s32.totalorder %s18, 0
      %p39 = por %p37, %p38
      %p40 = scmp.ne.s32.totalorder %s26, %s27
      %p41 = scmp.eq.s32.totalorder %s19, 1
      %p42 = por %p40, %p41
      %p44 = scmp.ne.s32.totalorder %s27, %s43
      %p45 = scmp.eq.s32.totalorder %s19, 0
      %p46 = por %p44, %p45
      %s48 = sadd.s32 %s47, 1
      %p51 = scmp.eq.s32.totalorder %s13, 1
      %p52 = scmp.ne.s32.totalorder %s47, %s49
      %p53 = scmp.eq.s32.totalorder %s13, 0
      %p54 = por %p52, %p53
      %p55 = scmp.ne.s32.totalorder %s47, %s49
      %p56 = scmp.eq.s32.totalorder %s18, 1
      %p57 = por %p55, %p56
      %p58 = scmp.ne.s32.totalorder %s49, %s50
      %p59 = scmp.eq.s32.totalorder %s18, 0
      %p60 = por %p58, %p59
      %p61 = scmp.ne.s32.totalorder %s49, %s50
      %p62 = scmp.eq.s32.totalorder %s19, 1
      %p63 = por %p61, %p62
      %p65 = scmp.ne.s32.totalorder %s50, %s64
      %p66 = scmp.eq.s32.totalorder %s19, 0
      %p67 = por %p65, %p66
      %s69 = sadd.s32 %s68, 1
      %p72 = scmp.eq.s32.totalorder %s13, 1
      %p73 = scmp.ne.s32.totalorder %s68, %s70
      %p74 = scmp.eq.s32.totalorder %s13, 0
      %p75 = por %p73, %p74
      %p76 = scmp.ne.s32.totalorder %s68, %s70
      %p77 = scmp.eq.s32.totalorder %s18, 1
      %p78 = por %p76, %p77
      %p79 = scmp.ne.s32.totalorder %s70, %s71
      %p80 = scmp.eq.s32.totalorder %s18, 0
      %p81 = por %p79, %p80
      %p82 = scmp.ne.s32.totalorder %s70, %s71
      %p83 = scmp.eq.s32.totalorder %s19, 1
      %p84 = por %p82, %p83
      %p86 = scmp.ne.s32.totalorder %s71, %s85
      %p87 = scmp.eq.s32.totalorder %s19, 0
      %p88 = por %p86, %p87
      %s90 = sadd.s32 %s89, 1
      %p93 = scmp.eq.s32.totalorder %s13, 1
      %p94 = scmp.ne.s32.totalorder %s89, %s91
      %p95 = scmp.eq.s32.totalorder %s13, 0
      %p96 = por %p94, %p95
      %p97 = scmp.ne.s32.totalorder %s89, %s91
      %p98 = scmp.eq.s32.totalorder %s18, 1
      %p99 = por %p97, %p98
      %p100 = scmp.ne.s32.totalorder %s91, %s92
      %p101 = scmp.eq.s32.totalorder %s18, 0
      %p102 = por %p100, %p101
      %p103 = scmp.ne.s32.totalorder %s91, %s92
      %p104 = scmp.eq.s32.totalorder %s19, 1
      %p105 = por %p103, %p104
      %p107 = scmp.ne.s32.totalorder %s92, %s106
      %p108 = scmp.eq.s32.totalorder %s19, 0
      %p109 = por %p107, %p108
      %s110 = ssub.s32 %s13, %s20
      %p111 = scmp.eq.s32.totalorder %s110, 0
      %s113 = sadd.s32 %s112, 1
      %s114 = scalar_select %p111, %s112, %s113
      %p117 = pneg %p111
      %p118 = scmp.eq.s32.totalorder %s13, 1
      %p119 = por %p117, %p118
      %p120 = scmp.ne.s32.totalorder %s112, %s115
      %p121 = scmp.eq.s32.totalorder %s13, 0
      %p122 = por %p120, %p121
      %p123 = scmp.ne.s32.totalorder %s112, %s115
      %p124 = scmp.eq.s32.totalorder %s18, 1
      %p125 = por %p123, %p124
      %p126 = scmp.ne.s32.totalorder %s115, %s116
      %p127 = scmp.eq.s32.totalorder %s18, 0
      %p128 = por %p126, %p127
      %p129 = scmp.ne.s32.totalorder %s115, %s116
      %p130 = scmp.eq.s32.totalorder %s19, 1
      %p131 = por %p129, %p130
      %p133 = scmp.ne.s32.totalorder %s116, %s132
      %p134 = scmp.eq.s32.totalorder %s19, 0
      %p135 = por %p133, %p134
      %p136 = scmp.le.s32.totalorder 1, %s13
      %p137 = scmp.lt.s32.totalorder %s13, 3
      %p138 = pnand %p136, %p137
      %p139 = pneg %p138
      // Predicated region
      $region9: #{tpu_custom_call.1} parent=5 // pred_check
        _
      $region10: #{tpu_custom_call.1} parent=5 // pred_check_branch
        %141 = sbr.rel (%p138) target = $region12
      $region11: #{tpu_custom_call.1} parent=5 // pred_region
        %s142 = ssub.s32 %s13, 1
        // Predicated region
        $region13: #{tpu_custom_call.1} parent=11 // pred_check
          %p143 = pneg %p60
        $region14: #{tpu_custom_call.1} parent=11 // pred_check_branch
          %145 = sbr.rel (%p143) target = $region16
        $region15: #{tpu_custom_call.1} parent=11 // pred_region
          _
        $region16: #{tpu_custom_call.1} parent=11 // pred_fallthru
          _
        // Predicated region
        $region17: #{tpu_custom_call.1} parent=11 // pred_check
          %p146 = pneg %p81
        $region18: #{tpu_custom_call.1} parent=11 // pred_check_branch
          %148 = sbr.rel (%p146) target = $region20
        $region19: #{tpu_custom_call.1} parent=11 // pred_region
          _
        $region20: #{tpu_custom_call.1} parent=11 // pred_fallthru
          _
        // Predicated region
        $region21: #{tpu_custom_call.1} parent=11 // pred_check
          %p149 = pneg %p102
        $region22: #{tpu_custom_call.1} parent=11 // pred_check_branch
          %151 = sbr.rel (%p149) target = $region24
        $region23: #{tpu_custom_call.1} parent=11 // pred_region
          _
        $region24: #{tpu_custom_call.1} parent=11 // pred_fallthru
          _
      $region12: #{tpu_custom_call.1} parent=5 // pred_fallthru
        _
      %p152 = scmp.lt.s32.totalorder %s13, 2
      // Predicated region
      $region25: #{tpu_custom_call.1} parent=5 // pred_check
        %p153 = pneg %p152
      $region26: #{tpu_custom_call.1} parent=5 // pred_check_branch
        %155 = sbr.rel (%p153) target = $region28
      $region27: #{tpu_custom_call.1} parent=5 // pred_region
        // Predicated region
        $region29: #{tpu_custom_call.1} parent=27 // pred_check
          %p156 = pneg %p33
        $region30: #{tpu_custom_call.1} parent=27 // pred_check_branch
          %158 = sbr.rel (%p156) target = $region32
        $region31: #{tpu_custom_call.1} parent=27 // pred_region
          %p159 = scmp.lt.s32.totalorder %s13, 1
          %s160 = scalar_select %p159, %s13, 1
          %s161 = smul.addr %s160, 2
          %s162 = smul.addr %s161, 4
          %s163 = scalar_lea.vmem %s0, %s162
        $region32: #{tpu_custom_call.1} parent=27 // pred_fallthru
          _
      $region28: #{tpu_custom_call.1} parent=5 // pred_fallthru
        _
      %p164 = scmp.le.s32.totalorder 1, %s13
      %p165 = scmp.lt.s32.totalorder %s13, 3
      %p166 = pnand %p164, %p165
      %p167 = pneg %p166
      // Predicated region
      $region33: #{tpu_custom_call.1} parent=5 // pred_check
        _
      $region34: #{tpu_custom_call.1} parent=5 // pred_check_branch
        %169 = sbr.rel (%p166) target = $region36
      $region35: #{tpu_custom_call.1} parent=5 // pred_region
        %s170 = ssub.s32 %s13, 1
        %p171 = scmp.lt.s32.totalorder %s18, 1
        %s172 = scalar_select %p171, %s18, 1
        %s173 = smul.addr %s172, 2
        %s174 = smul.addr %s173, 4
        %s175 = scalar_lea.vmem %s0, %s174
        %p176 = pneg %p39
        %p177 = pneg %p36
        %p178 = pneg %p60
        %p179 = pneg %p57
        %p180 = pneg %p81
        %p181 = pneg %p78
        %p182 = pneg %p102
        %p183 = pneg %p99
        %p184 = pneg %p128
        %p185 = pneg %p125
        %s186 = sand.u32 %s115, 1
        %s187 = scalar_lea.sflag [#allocation3], %s186
        %s188 = sand.u32 %s115, 1
        %s189 = smul.addr %s188, 8
        %s190 = scalar_lea.vmem [#allocation2], %s189
        %p191 = scmp.lt.s32.totalorder %s18, 1
        %s192 = scalar_select %p191, %s18, 1
        %s193 = smul.addr %s192, 2
        %s194 = smul.addr %s193, 4
        %s195 = scalar_lea.vmem %s0, %s194
        %v196 = vld [vmem:[%s195] sm:$0xff]
        %v198 = vcombine.high %v196, %v196
        %200 = vmatprep.subr.mxu0 0.0
        %201 = vmatpush1.msra.mxu0 1.0
        %202 = vmatprep.subr.mxu0 0.0
        %203 = vmatpush1.msra.mxu0 1.0
        %204 = vmatprep.subr.mxu0 0.0
        %205 = vmatpush1.msra.mxu0 1.0
        %206 = vmatprep.subr.mxu0 0.0
        %207 = vmatpush1.msra.mxu0 1.0
        %208 = vmatprep.subr.mxu0 0.0
        %209 = vmatpush1.msra.mxu0 1.0
        %210 = vmatprep.subr.mxu0 0.0
        %211 = vmatpush1.msra.mxu0 1.0
        %212 = vmatprep.subr.mxu0 0.0
        %213 = vmatpush1.msra.mxu0 1.0
        %214 = vmatprep.subr.mxu0 0.0
        %215 = vmatpush1.msra.mxu0 1.0
        %216 = vmatprep.subr.mxu0 0.0
        %217 = vmatpush1.msra.mxu0 1.0
        %218 = vmatprep.subr.mxu0 0.0
        %219 = vmatpush1.msra.mxu0 1.0
        %220 = vmatprep.subr.mxu0 0.0
        %221 = vmatpush1.msra.mxu0 1.0
        %222 = vmatprep.subr.mxu0 0.0
        %223 = vmatpush1.msra.mxu0 1.0
        %224 = vmatprep.subr.mxu0 0.0
        %225 = vmatpush1.msra.mxu0 1.0
        %226 = vmatprep.subr.mxu0 0.0
        %227 = vmatpush1.msra.mxu0 1.0
        %228 = vmatprep.subr.mxu0 0.0
        %229 = vmatpush1.msra.mxu0 1.0
        %230 = vmatprep.subr.mxu0 0.0
        %231 = vmatpush1.msra.mxu0 1.0
        %232 = vmatprep.subr.mxu0 0.0
        %233 = vmatpush1.msra.mxu0 1.0
        %234 = vmatprep.subr.mxu0 0.0
        %235 = vmatpush1.msra.mxu0 1.0
        %236 = vmatprep.subr.mxu0 0.0
        %237 = vmatpush1.msra.mxu0 1.0
        %238 = vmatprep.subr.mxu0 0.0
        %239 = vmatpush1.msra.mxu0 1.0
        %240 = vmatprep.subr.mxu0 0.0
        %241 = vmatpush1.msra.mxu0 1.0
        %242 = vmatprep.subr.mxu0 0.0
        %243 = vmatpush1.msra.mxu0 1.0
        %244 = vmatprep.subr.mxu0 0.0
        %245 = vmatpush1.msra.mxu0 1.0
        %246 = vmatprep.subr.mxu0 0.0
        %247 = vmatpush1.msra.mxu0 1.0
        %248 = vmatprep.subr.mxu0 0.0
        %249 = vmatpush1.msra.mxu0 1.0
        %250 = vmatprep.subr.mxu0 0.0
        %251 = vmatpush1.msra.mxu0 1.0
        %252 = vmatprep.subr.mxu0 0.0
        %253 = vmatpush1.msra.mxu0 1.0
        %254 = vmatprep.subr.mxu0 0.0
        %255 = vmatpush1.msra.mxu0 1.0
        %256 = vmatprep.subr.mxu0 0.0
        %257 = vmatpush1.msra.mxu0 1.0
        %258 = vmatprep.subr.mxu0 0.0
        %259 = vmatpush1.msra.mxu0 1.0
        %260 = vmatprep.subr.mxu0 0.0
        %261 = vmatpush1.msra.mxu0 1.0
        %262 = vmatprep.subr.mxu0 0.0
        %263 = vmatpush1.msra.mxu0 1.0
        %264 = vmatprep.mubr.f32.mxu0 %v198
        %265 = vmatmul.mubr.f32.gmra.mrb[0].mxu0 %v196
        %v266 = vpop.f32.mrb[0].mxu0
        %v267 = vadd.f32 0.0, %v266
        %v268 = vpop.f32.mrb[0].mxu0
        %269 = vdwg.mxu0
        %v270 = vmul.f32 %v267, 0.00390625
        %v271 = vld [vmem:[%s1] sm:$0xf]
        %v272 = vld [vmem:[%s2] sm:$0xf]
        %vm273 = vcmask 31744
        %v275 = vsel %vm273, %v271, 0
        %vm277 = vcmask 1043456
        %v279 = vsel %vm277, %v270, 0
        %281 = vmatprep.subr.mxu0 0.0
        %282 = vmatpush1.msra.mxu0 %v279
        %283 = vmatprep.subr.mxu0 0.0
        %284 = vmatpush1.msra.mxu0 0.0
        %285 = vmatprep.subr.mxu0 0.0
        %286 = vmatpush1.msra.mxu0 0.0
        %287 = vmatprep.subr.mxu0 0.0
        %288 = vmatpush1.msra.mxu0 0.0
        %289 = vmatprep.subr.mxu0 0.0
        %290 = vmatpush1.msra.mxu0 0.0
        %291 = vmatprep.subr.mxu0 0.0
        %292 = vmatpush1.msra.mxu0 0.0
        %293 = vmatprep.subr.mxu0 0.0
        %294 = vmatpush1.msra.mxu0 0.0
        %295 = vmatprep.subr.mxu0 0.0
        %296 = vmatpush1.msra.mxu0 0.0
        %297 = vmatprep.subr.mxu0 0.0
        %298 = vmatpush1.msra.mxu0 0.0
        %299 = vmatprep.subr.mxu0 0.0
        %300 = vmatpush1.msra.mxu0 0.0
        %301 = vmatprep.subr.mxu0 0.0
        %302 = vmatpush1.msra.mxu0 0.0
        %303 = vmatprep.subr.mxu0 0.0
        %304 = vmatpush1.msra.mxu0 0.0
        %305 = vmatprep.subr.mxu0 0.0
        %306 = vmatpush1.msra.mxu0 0.0
        %307 = vmatprep.subr.mxu0 0.0
        %308 = vmatpush1.msra.mxu0 0.0
        %309 = vmatprep.subr.mxu0 0.0
        %310 = vmatpush1.msra.mxu0 0.0
        %311 = vmatprep.subr.mxu0 0.0
        %312 = vmatpush1.msra.mxu0 0.0
        %313 = vmatprep.subr.mxu0 0.0
        %314 = vmatpush1.msra.mxu0 0.0
        %315 = vmatprep.subr.mxu0 0.0
        %316 = vmatpush1.msra.mxu0 0.0
        %317 = vmatprep.subr.mxu0 0.0
        %318 = vmatpush1.msra.mxu0 0.0
        %319 = vmatprep.subr.mxu0 0.0
        %320 = vmatpush1.msra.mxu0 0.0
        %321 = vmatprep.subr.mxu0 0.0
        %322 = vmatpush1.msra.mxu0 0.0
        %323 = vmatprep.subr.mxu0 0.0
        %324 = vmatpush1.msra.mxu0 0.0
        %325 = vmatprep.subr.mxu0 0.0
        %326 = vmatpush1.msra.mxu0 0.0
        %327 = vmatprep.subr.mxu0 0.0
        %328 = vmatpush1.msra.mxu0 0.0
        %329 = vmatprep.subr.mxu0 0.0
        %330 = vmatpush1.msra.mxu0 0.0
        %331 = vmatprep.subr.mxu0 0.0
        %332 = vmatpush1.msra.mxu0 0.0
        %333 = vmatprep.subr.mxu0 0.0
        %334 = vmatpush1.msra.mxu0 0.0
        %335 = vmatprep.subr.mxu0 0.0
        %336 = vmatpush1.msra.mxu0 0.0
        %337 = vmatprep.subr.mxu0 0.0
        %338 = vmatpush1.msra.mxu0 0.0
        %339 = vmatprep.subr.mxu0 0.0
        %340 = vmatpush1.msra.mxu0 0.0
        %341 = vmatprep.subr.mxu0 0.0
        %342 = vmatpush1.msra.mxu0 0.0
        %343 = vmatprep.subr.mxu0 0.0
        %344 = vmatpush1.msra.mxu0 0.0
        %345 = vmatprep.mubr.f32.mxu0 0.0
        %346 = vmatmul.mubr.f32.gmra.mrb[0].mxu0 %v275
        %v347 = vpop.f32.mrb[0].mxu0
        %v348 = vadd.f32 %v272, %v347
        %v349 = vpop.f32.mrb[0].mxu0
        %350 = vdwg.mxu0
        %v351 = vxor.u32 %v348, 2147483648
        %v352 = vmul.f32 %v351, 1.442695
        %v353 = vpow.pop %v352
        %v354 = vadd.f32 %v353, 1.0
        %v355 = vrcp.pop %v354
        %v356 = vmul.f32 1.0, %v355
        %358 = vset.pattern.permute.xlu0 0
        %359 = vperm.xlu0 %358, %v356
        %v360 = vpop.permute.xlu0 %359
        %v362 = vunpack.c.l.s4 839922192
        %v363 = vunpack.c.0.s8 %v362
        %v364 = vlaneseq
        %v365 = vshrl.u32 %v364, 7
        %v366 = vsub.s32 %v363, %v365
        %v367 = vrot.slane %v360, %v366
        %v369 = vmul.f32 %v196, %v367
        %v371 = vcombine.high %v369, %v369
        %v373 = vsel %vm273, 1.0, 0
        %v375 = vsel %vm277, %v369, 0
        %v377 = vsel %vm277, %v371, 0
        %379 = vmatprep.subr.mxu0 %v377
        %380 = vmatpush1.msra.mxu0 %v375
        %381 = vmatprep.subr.mxu0 0.0
        %382 = vmatpush1.msra.mxu0 0.0
        %383 = vmatprep.subr.mxu0 0.0
        %384 = vmatpush1.msra.mxu0 0.0
        %385 = vmatprep.subr.mxu0 0.0
        %386 = vmatpush1.msra.mxu0 0.0
        %387 = vmatprep.subr.mxu0 0.0
        %388 = vmatpush1.msra.mxu0 0.0
        %389 = vmatprep.subr.mxu0 0.0
        %390 = vmatpush1.msra.mxu0 0.0
        %391 = vmatprep.subr.mxu0 0.0
        %392 = vmatpush1.msra.mxu0 0.0
        %393 = vmatprep.subr.mxu0 0.0
        %394 = vmatpush1.msra.mxu0 0.0
        %395 = vmatprep.subr.mxu0 0.0
        %396 = vmatpush1.msra.mxu0 0.0
        %397 = vmatprep.subr.mxu0 0.0
        %398 = vmatpush1.msra.mxu0 0.0
        %399 = vmatprep.subr.mxu0 0.0
        %400 = vmatpush1.msra.mxu0 0.0
        %401 = vmatprep.subr.mxu0 0.0
        %402 = vmatpush1.msra.mxu0 0.0
        %403 = vmatprep.subr.mxu0 0.0
        %404 = vmatpush1.msra.mxu0 0.0
        %405 = vmatprep.subr.mxu0 0.0
        %406 = vmatpush1.msra.mxu0 0.0
        %407 = vmatprep.subr.mxu0 0.0
        %408 = vmatpush1.msra.mxu0 0.0
        %409 = vmatprep.subr.mxu0 0.0
        %410 = vmatpush1.msra.mxu0 0.0
        %411 = vmatprep.subr.mxu0 0.0
        %412 = vmatpush1.msra.mxu0 0.0
        %413 = vmatprep.subr.mxu0 0.0
        %414 = vmatpush1.msra.mxu0 0.0
        %415 = vmatprep.subr.mxu0 0.0
        %416 = vmatpush1.msra.mxu0 0.0
        %417 = vmatprep.subr.mxu0 0.0
        %418 = vmatpush1.msra.mxu0 0.0
        %419 = vmatprep.subr.mxu0 0.0
        %420 = vmatpush1.msra.mxu0 0.0
        %421 = vmatprep.subr.mxu0 0.0
        %422 = vmatpush1.msra.mxu0 0.0
        %423 = vmatprep.subr.mxu0 0.0
        %424 = vmatpush1.msra.mxu0 0.0
        %425 = vmatprep.subr.mxu0 0.0
        %426 = vmatpush1.msra.mxu0 0.0
        %427 = vmatprep.subr.mxu0 0.0
        %428 = vmatpush1.msra.mxu0 0.0
        %429 = vmatprep.subr.mxu0 0.0
        %430 = vmatpush1.msra.mxu0 0.0
        %431 = vmatprep.subr.mxu0 0.0
        %432 = vmatpush1.msra.mxu0 0.0
        %433 = vmatprep.subr.mxu0 0.0
        %434 = vmatpush1.msra.mxu0 0.0
        %435 = vmatprep.subr.mxu0 0.0
        %436 = vmatpush1.msra.mxu0 0.0
        %437 = vmatprep.subr.mxu0 0.0
        %438 = vmatpush1.msra.mxu0 0.0
        %439 = vmatprep.subr.mxu0 0.0
        %440 = vmatpush1.msra.mxu0 0.0
        %441 = vmatprep.subr.mxu0 0.0
        %442 = vmatpush1.msra.mxu0 0.0
        %443 = vmatprep.mubr.f32.mxu0 0.0
        %444 = vmatmul.mubr.f32.gmra.mrb[0].mxu0 %v373
        %v445 = vpop.f32.mrb[0].mxu0
        %v446 = vadd.f32 0.0, %v445
        %v447 = vpop.f32.mrb[0].mxu0
        %v448 = vadd.f32 0.0, %v447
        %449 = vdwg.mxu0
        %v450 = vmul.f32 %v446, 0.25
        %v451 = vmul.f32 %v448, 0.25
        %v453 = vsel %vm277, %v369, -inf
        %v454 = vrot.slane %v453, 4
        %v455 = vmax.f32 %v453, %v454
        %v456 = vrot.slane %v455, 2
        %v457 = vmax.f32 %v455, %v456
        %v458 = vrot.slane %v457, 1
        %v459 = vmax.f32 %v457, %v458
        %v460 = vsel %vm277, %v371, -inf
        %v461 = vrot.slane %v460, 4
        %v462 = vmax.f32 %v460, %v461
        %v463 = vrot.slane %v462, 2
        %v464 = vmax.f32 %v462, %v463
        %v465 = vrot.slane %v464, 1
        %v466 = vmax.f32 %v464, %v465
        %v468 = vrot.slane %v450, 7
        %469 = vrot.lane.b32.xlu0 %v468, 112
        %v470 = vpop.permute.xlu0 %469
        %v472 = vrot.slane %v450, 6
        %473 = vrot.lane.b32.xlu0 %v472, 96
        %v474 = vpop.permute.xlu0 %473
        %v476 = vrot.slane %v450, 5
        %477 = vrot.lane.b32.xlu0 %v476, 80
        %v478 = vpop.permute.xlu0 %477
        %v480 = vrot.slane %v450, 4
        %481 = vrot.lane.b32.xlu0 %v480, 64
        %v482 = vpop.permute.xlu0 %481
        %v484 = vrot.slane %v450, 3
        %485 = vrot.lane.b32.xlu0 %v484, 48
        %v486 = vpop.permute.xlu0 %485
        %v488 = vrot.slane %v450, 2
        %489 = vrot.lane.b32.xlu0 %v488, 32
        %v490 = vpop.permute.xlu0 %489
        %v492 = vrot.slane %v450, 1
        %493 = vrot.lane.b32.xlu0 %v492, 16
        %v494 = vpop.permute.xlu0 %493
        %v497 = vrot.slane %v451, 7
        %498 = vrot.lane.b32.xlu0 %v497, 112
        %v499 = vpop.permute.xlu0 %498
        %v501 = vrot.slane %v451, 6
        %502 = vrot.lane.b32.xlu0 %v501, 96
        %v503 = vpop.permute.xlu0 %502
        %v505 = vrot.slane %v451, 5
        %506 = vrot.lane.b32.xlu0 %v505, 80
        %v507 = vpop.permute.xlu0 %506
        %v509 = vrot.slane %v451, 4
        %510 = vrot.lane.b32.xlu0 %v509, 64
        %v511 = vpop.permute.xlu0 %510
        %v513 = vrot.slane %v451, 3
        %514 = vrot.lane.b32.xlu0 %v513, 48
        %v515 = vpop.permute.xlu0 %514
        %v517 = vrot.slane %v451, 2
        %518 = vrot.lane.b32.xlu0 %v517, 32
        %v519 = vpop.permute.xlu0 %518
        %v521 = vrot.slane %v451, 1
        %522 = vrot.lane.b32.xlu0 %v521, 16
        %v523 = vpop.permute.xlu0 %522
        %vm525 = vcmask 1040384
        %v526 = vsel %vm525, %v450, %v470
        %vm527 = vcmask 1041408
        %v528 = vsel %vm527, %v526, %v474
        %vm529 = vcmask 1042432
        %v530 = vsel %vm529, %v528, %v478
        %v531 = vsel %vm277, %v530, %v482
        %vm532 = vcmask 1044480
        %v533 = vsel %vm532, %v531, %v486
        %vm534 = vcmask 1045504
        %v535 = vsel %vm534, %v533, %v490
        %vm536 = vcmask 1046528
        %v537 = vsel %vm536, %v535, %v494
        %v538 = vsel %vm525, %v451, %v499
        %v539 = vsel %vm527, %v538, %v503
        %v540 = vsel %vm529, %v539, %v507
        %v541 = vsel %vm277, %v540, %v511
        %v542 = vsel %vm532, %v541, %v515
        %v543 = vsel %vm534, %v542, %v519
        %v544 = vsel %vm536, %v543, %v523
        %v547 = vrot.slane %v537, 5
        %v548 = vrot.slane %v544, 5
        %v549 = vsel %vm529, %v547, %v548
        %v553 = vsel %vm529, 0.0, %v547
        %v554 = vsel %vm529, %v548, 0.0
        %556 = vrot.lane.b32.xlu0 %v459, 112
        %v557 = vpop.permute.xlu0 %556
        %559 = vrot.lane.b32.xlu0 %v459, 96
        %v560 = vpop.permute.xlu0 %559
        %562 = vrot.lane.b32.xlu0 %v459, 80
        %v563 = vpop.permute.xlu0 %562
        %565 = vrot.lane.b32.xlu0 %v459, 64
        %v566 = vpop.permute.xlu0 %565
        %568 = vrot.lane.b32.xlu0 %v459, 48
        %v569 = vpop.permute.xlu0 %568
        %571 = vrot.lane.b32.xlu0 %v459, 32
        %v572 = vpop.permute.xlu0 %571
        %574 = vrot.lane.b32.xlu0 %v459, 16
        %v575 = vpop.permute.xlu0 %574
        %578 = vrot.lane.b32.xlu0 %v466, 112
        %v579 = vpop.permute.xlu0 %578
        %581 = vrot.lane.b32.xlu0 %v466, 96
        %v582 = vpop.permute.xlu0 %581
        %584 = vrot.lane.b32.xlu0 %v466, 80
        %v585 = vpop.permute.xlu0 %584
        %587 = vrot.lane.b32.xlu0 %v466, 64
        %v588 = vpop.permute.xlu0 %587
        %590 = vrot.lane.b32.xlu0 %v466, 48
        %v591 = vpop.permute.xlu0 %590
        %593 = vrot.lane.b32.xlu0 %v466, 32
        %v594 = vpop.permute.xlu0 %593
        %596 = vrot.lane.b32.xlu0 %v466, 16
        %v597 = vpop.permute.xlu0 %596
        %v599 = vsel %vm525, %v459, %v557
        %v600 = vsel %vm527, %v599, %v560
        %v601 = vsel %vm529, %v600, %v563
        %v602 = vsel %vm277, %v601, %v566
        %v603 = vsel %vm532, %v602, %v569
        %v604 = vsel %vm534, %v603, %v572
        %v605 = vsel %vm536, %v604, %v575
        %v606 = vsel %vm525, %v466, %v579
        %v607 = vsel %vm527, %v606, %v582
        %v608 = vsel %vm529, %v607, %v585
        %v609 = vsel %vm277, %v608, %v588
        %v610 = vsel %vm532, %v609, %v591
        %v611 = vsel %vm534, %v610, %v594
        %v612 = vsel %vm536, %v611, %v597
        %v615 = vrot.slane %v605, 5
        %v616 = vrot.slane %v612, 5
        %v617 = vsel %vm529, %v615, %v616
        %v620 = vsel %vm529, 0.0, %v615
        %v621 = vsel %vm529, %v616, 0.0
        %624 = vrot.lane.b32.xlu0 %v620, 16
        %v625 = vpop.permute.xlu0 %624
        %626 = vrot.lane.b32.xlu0 %v617, 16
        %v627 = vpop.permute.xlu0 %626
        %628 = vrot.lane.b32.xlu0 %v621, 16
        %v629 = vpop.permute.xlu0 %628
        %vm633 = vcmask 130048
        %v634 = vsel %vm633, %v553, %v625
        %v635 = vsel %vm633, %v549, %v627
        %v636 = vsel %vm633, %v554, %v629
        %v637 = vld [vmem:[%s3] sm:$0xff]
        %v638 = vld [vmem:[%s3 + $0x8] sm:$0xff]
        %v639 = vld [vmem:[%s3 + $0x10] sm:$0xff]
        %v640 = vld [vmem:[%s3 + $0x18] sm:$0xff]
        %s641 = scalar_lea.vmem %s3, 32
        %v642 = vld [vmem:[%s641] sm:$0xff]
        %v643 = vld [vmem:[%s641 + $0x8] sm:$0xff]
        %v644 = vld [vmem:[%s641 + $0x10] sm:$0xff]
        %v645 = vld [vmem:[%s641 + $0x18] sm:$0xff]
        %s646 = scalar_lea.vmem %s3, 64
        %v647 = vld [vmem:[%s646] sm:$0xff]
        %v648 = vld [vmem:[%s646 + $0x8] sm:$0xff]
        %v649 = vld [vmem:[%s646 + $0x10] sm:$0xff]
        %v650 = vld [vmem:[%s646 + $0x18] sm:$0xff]
        %v654 = vrot.slane %v634, 2
        %v655 = vrot.slane %v635, 2
        %v656 = vsel %vm534, %v654, %v655
        %v657 = vrot.slane %v636, 2
        %v658 = vsel %vm534, %v655, %v657
        %vm659 = vcmask 261120
        %v660 = vsel %vm659, %v656, 0
        %v662 = vsel %vm659, %v658, 0
        %664 = vmatprep.subr.mxu0 0.0
        %665 = vmatpush1.msra.mxu0 %v647
        %666 = vmatprep.subr.mxu0 0.0
        %667 = vmatpush1.msra.mxu0 %v648
        %668 = vmatprep.subr.mxu0 0.0
        %669 = vmatpush1.msra.mxu0 %v649
        %670 = vmatprep.subr.mxu0 0.0
        %671 = vmatpush1.msra.mxu0 %v650
        %672 = vmatprep.subr.mxu0 0.0
        %673 = vmatpush1.msra.mxu0 0.0
        %674 = vmatprep.subr.mxu0 0.0
        %675 = vmatpush1.msra.mxu0 0.0
        %676 = vmatprep.subr.mxu0 0.0
        %677 = vmatpush1.msra.mxu0 0.0
        %678 = vmatprep.subr.mxu0 0.0
        %679 = vmatpush1.msra.mxu0 0.0
        %680 = vmatprep.subr.mxu0 0.0
        %681 = vmatpush1.msra.mxu0 0.0
        %682 = vmatprep.subr.mxu0 0.0
        %683 = vmatpush1.msra.mxu0 0.0
        %684 = vmatprep.subr.mxu0 0.0
        %685 = vmatpush1.msra.mxu0 0.0
        %686 = vmatprep.subr.mxu0 0.0
        %687 = vmatpush1.msra.mxu0 0.0
        %688 = vmatprep.subr.mxu0 0.0
        %689 = vmatpush1.msra.mxu0 0.0
        %690 = vmatprep.subr.mxu0 0.0
        %691 = vmatpush1.msra.mxu0 0.0
        %692 = vmatprep.subr.mxu0 0.0
        %693 = vmatpush1.msra.mxu0 0.0
        %694 = vmatprep.subr.mxu0 0.0
        %695 = vmatpush1.msra.mxu0 0.0
        %696 = vmatprep.subr.mxu0 0.0
        %697 = vmatpush1.msra.mxu0 0.0
        %698 = vmatprep.subr.mxu0 0.0
        %699 = vmatpush1.msra.mxu0 0.0
        %700 = vmatprep.subr.mxu0 0.0
        %701 = vmatpush1.msra.mxu0 0.0
        %702 = vmatprep.subr.mxu0 0.0
        %703 = vmatpush1.msra.mxu0 0.0
        %704 = vmatprep.subr.mxu0 0.0
        %705 = vmatpush1.msra.mxu0 0.0
        %706 = vmatprep.subr.mxu0 0.0
        %707 = vmatpush1.msra.mxu0 0.0
        %708 = vmatprep.subr.mxu0 0.0
        %709 = vmatpush1.msra.mxu0 0.0
        %710 = vmatprep.subr.mxu0 0.0
        %711 = vmatpush1.msra.mxu0 0.0
        %712 = vmatprep.subr.mxu0 0.0
        %713 = vmatpush1.msra.mxu0 0.0
        %714 = vmatprep.subr.mxu0 0.0
        %715 = vmatpush1.msra.mxu0 0.0
        %716 = vmatprep.subr.mxu0 0.0
        %717 = vmatpush1.msra.mxu0 0.0
        %718 = vmatprep.subr.mxu0 0.0
        %719 = vmatpush1.msra.mxu0 0.0
        %720 = vmatprep.subr.mxu0 0.0
        %721 = vmatpush1.msra.mxu0 0.0
        %722 = vmatprep.subr.mxu0 0.0
        %723 = vmatpush1.msra.mxu0 0.0
        %724 = vmatprep.subr.mxu0 0.0
        %725 = vmatpush1.msra.mxu0 0.0
        %726 = vmatprep.subr.mxu0 0.0
        %727 = vmatpush1.msra.mxu0 0.0
        %728 = vmatprep.mubr.f32.mxu0 0.0
        %729 = vmatmul.mubr.f32.gmra.mrb[0].mxu0 %v660
        %v730 = vpop.f32.mrb[0].mxu0
        %v731 = vadd.f32 0.0, %v730
        %v732 = vpop.f32.mrb[0].mxu0
        %733 = vmatprep.mubr.f32.mxu0 0.0
        %734 = vmatmul.mubr.f32.gmra.mrb[0].mxu0 %v662
        %v735 = vpop.f32.mrb[0].mxu0
        %v736 = vadd.f32 0.0, %v735
        %v737 = vpop.f32.mrb[0].mxu0
        %738 = vdwg.mxu0
        %v739 = vsel %vm659, %v634, 0
        %v741 = vsel %vm659, %v635, 0
        %743 = vmatprep.subr.mxu0 0.0
        %744 = vmatpush1.msra.mxu0 %v637
        %745 = vmatprep.subr.mxu0 0.0
        %746 = vmatpush1.msra.mxu0 %v638
        %747 = vmatprep.subr.mxu0 0.0
        %748 = vmatpush1.msra.mxu0 %v639
        %749 = vmatprep.subr.mxu0 0.0
        %750 = vmatpush1.msra.mxu0 %v640
        %751 = vmatprep.subr.mxu0 0.0
        %752 = vmatpush1.msra.mxu0 0.0
        %753 = vmatprep.subr.mxu0 0.0
        %754 = vmatpush1.msra.mxu0 0.0
        %755 = vmatprep.subr.mxu0 0.0
        %756 = vmatpush1.msra.mxu0 0.0
        %757 = vmatprep.subr.mxu0 0.0
        %758 = vmatpush1.msra.mxu0 0.0
        %759 = vmatprep.subr.mxu0 0.0
        %760 = vmatpush1.msra.mxu0 0.0
        %761 = vmatprep.subr.mxu0 0.0
        %762 = vmatpush1.msra.mxu0 0.0
        %763 = vmatprep.subr.mxu0 0.0
        %764 = vmatpush1.msra.mxu0 0.0
        %765 = vmatprep.subr.mxu0 0.0
        %766 = vmatpush1.msra.mxu0 0.0
        %767 = vmatprep.subr.mxu0 0.0
        %768 = vmatpush1.msra.mxu0 0.0
        %769 = vmatprep.subr.mxu0 0.0
        %770 = vmatpush1.msra.mxu0 0.0
        %771 = vmatprep.subr.mxu0 0.0
        %772 = vmatpush1.msra.mxu0 0.0
        %773 = vmatprep.subr.mxu0 0.0
        %774 = vmatpush1.msra.mxu0 0.0
        %775 = vmatprep.subr.mxu0 0.0
        %776 = vmatpush1.msra.mxu0 0.0
        %777 = vmatprep.subr.mxu0 0.0
        %778 = vmatpush1.msra.mxu0 0.0
        %779 = vmatprep.subr.mxu0 0.0
        %780 = vmatpush1.msra.mxu0 0.0
        %781 = vmatprep.subr.mxu0 0.0
        %782 = vmatpush1.msra.mxu0 0.0
        %783 = vmatprep.subr.mxu0 0.0
        %784 = vmatpush1.msra.mxu0 0.0
        %785 = vmatprep.subr.mxu0 0.0
        %786 = vmatpush1.msra.mxu0 0.0
        %787 = vmatprep.subr.mxu0 0.0
        %788 = vmatpush1.msra.mxu0 0.0
        %789 = vmatprep.subr.mxu0 0.0
        %790 = vmatpush1.msra.mxu0 0.0
        %791 = vmatprep.subr.mxu0 0.0
        %792 = vmatpush1.msra.mxu0 0.0
        %793 = vmatprep.subr.mxu0 0.0
        %794 = vmatpush1.msra.mxu0 0.0
        %795 = vmatprep.subr.mxu0 0.0
        %796 = vmatpush1.msra.mxu0 0.0
        %797 = vmatprep.subr.mxu0 0.0
        %798 = vmatpush1.msra.mxu0 0.0
        %799 = vmatprep.subr.mxu0 0.0
        %800 = vmatpush1.msra.mxu0 0.0
        %801 = vmatprep.subr.mxu0 0.0
        %802 = vmatpush1.msra.mxu0 0.0
        %803 = vmatprep.subr.mxu0 0.0
        %804 = vmatpush1.msra.mxu0 0.0
        %805 = vmatprep.subr.mxu0 0.0
        %806 = vmatpush1.msra.mxu0 0.0
        %807 = vmatprep.mubr.f32.mxu0 0.0
        %808 = vmatmul.mubr.f32.gmra.mrb[0].mxu0 %v739
        %v809 = vpop.f32.mrb[0].mxu0
        %v810 = vadd.f32 %v731, %v809
        %v811 = vpop.f32.mrb[0].mxu0
        %812 = vmatprep.mubr.f32.mxu0 0.0
        %813 = vmatmul.mubr.f32.gmra.mrb[0].mxu0 %v741
        %v814 = vpop.f32.mrb[0].mxu0
        %v815 = vadd.f32 %v736, %v814
        %v816 = vpop.f32.mrb[0].mxu0
        %817 = vdwg.mxu0
        %s818 = scalar_lea.vmem %s3, 96
        %v819 = vld [vmem:[%s818] sm:$0xff]
        %v820 = vld [vmem:[%s818 + $0x8] sm:$0xff]
        %v821 = vld [vmem:[%s818 + $0x10] sm:$0xff]
        %v822 = vld [vmem:[%s818 + $0x18] sm:$0xff]
        %v823 = vrot.slane %v634, 3
        %v824 = vrot.slane %v635, 3
        %v825 = vsel %vm532, %v823, %v824
        %v826 = vrot.slane %v636, 3
        %v827 = vsel %vm532, %v824, %v826
        %v828 = vsel %vm659, %v825, 0
        %v830 = vsel %vm659, %v827, 0
        %832 = vmatprep.subr.mxu0 0.0
        %833 = vmatpush1.msra.mxu0 %v819
        %834 = vmatprep.subr.mxu0 0.0
        %835 = vmatpush1.msra.mxu0 %v820
        %836 = vmatprep.subr.mxu0 0.0
        %837 = vmatpush1.msra.mxu0 %v821
        %838 = vmatprep.subr.mxu0 0.0
        %839 = vmatpush1.msra.mxu0 %v822
        %840 = vmatprep.subr.mxu0 0.0
        %841 = vmatpush1.msra.mxu0 0.0
        %842 = vmatprep.subr.mxu0 0.0
        %843 = vmatpush1.msra.mxu0 0.0
        %844 = vmatprep.subr.mxu0 0.0
        %845 = vmatpush1.msra.mxu0 0.0
        %846 = vmatprep.subr.mxu0 0.0
        %847 = vmatpush1.msra.mxu0 0.0
        %848 = vmatprep.subr.mxu0 0.0
        %849 = vmatpush1.msra.mxu0 0.0
        %850 = vmatprep.subr.mxu0 0.0
        %851 = vmatpush1.msra.mxu0 0.0
        %852 = vmatprep.subr.mxu0 0.0
        %853 = vmatpush1.msra.mxu0 0.0
        %854 = vmatprep.subr.mxu0 0.0
        %855 = vmatpush1.msra.mxu0 0.0
        %856 = vmatprep.subr.mxu0 0.0
        %857 = vmatpush1.msra.mxu0 0.0
        %858 = vmatprep.subr.mxu0 0.0
        %859 = vmatpush1.msra.mxu0 0.0
        %860 = vmatprep.subr.mxu0 0.0
        %861 = vmatpush1.msra.mxu0 0.0
        %862 = vmatprep.subr.mxu0 0.0
        %863 = vmatpush1.msra.mxu0 0.0
        %864 = vmatprep.subr.mxu0 0.0
        %865 = vmatpush1.msra.mxu0 0.0
        %866 = vmatprep.subr.mxu0 0.0
        %867 = vmatpush1.msra.mxu0 0.0
        %868 = vmatprep.subr.mxu0 0.0
        %869 = vmatpush1.msra.mxu0 0.0
        %870 = vmatprep.subr.mxu0 0.0
        %871 = vmatpush1.msra.mxu0 0.0
        %872 = vmatprep.subr.mxu0 0.0
        %873 = vmatpush1.msra.mxu0 0.0
        %874 = vmatprep.subr.mxu0 0.0
        %875 = vmatpush1.msra.mxu0 0.0
        %876 = vmatprep.subr.mxu0 0.0
        %877 = vmatpush1.msra.mxu0 0.0
        %878 = vmatprep.subr.mxu0 0.0
        %879 = vmatpush1.msra.mxu0 0.0
        %880 = vmatprep.subr.mxu0 0.0
        %881 = vmatpush1.msra.mxu0 0.0
        %882 = vmatprep.subr.mxu0 0.0
        %883 = vmatpush1.msra.mxu0 0.0
        %884 = vmatprep.subr.mxu0 0.0
        %885 = vmatpush1.msra.mxu0 0.0
        %886 = vmatprep.subr.mxu0 0.0
        %887 = vmatpush1.msra.mxu0 0.0
        %888 = vmatprep.subr.mxu0 0.0
        %889 = vmatpush1.msra.mxu0 0.0
        %890 = vmatprep.subr.mxu0 0.0
        %891 = vmatpush1.msra.mxu0 0.0
        %892 = vmatprep.subr.mxu0 0.0
        %893 = vmatpush1.msra.mxu0 0.0
        %894 = vmatprep.subr.mxu0 0.0
        %895 = vmatpush1.msra.mxu0 0.0
        %896 = vmatprep.mubr.f32.mxu0 0.0
        %897 = vmatmul.mubr.f32.gmra.mrb[0].mxu0 %v828
        %v898 = vpop.f32.mrb[0].mxu0
        %v899 = vadd.f32 0.0, %v898
        %v900 = vpop.f32.mrb[0].mxu0
        %901 = vmatprep.mubr.f32.mxu0 0.0
        %902 = vmatmul.mubr.f32.gmra.mrb[0].mxu0 %v830
        %v903 = vpop.f32.mrb[0].mxu0
        %v904 = vadd.f32 0.0, %v903
        %v905 = vpop.f32.mrb[0].mxu0
        %906 = vdwg.mxu0
        %v907 = vrot.slane %v634, 1
        %v908 = vrot.slane %v635, 1
        %v909 = vsel %vm536, %v907, %v908
        %v910 = vrot.slane %v636, 1
        %v911 = vsel %vm536, %v908, %v910
        %v912 = vsel %vm659, %v909, 0
        %v914 = vsel %vm659, %v911, 0
        %916 = vmatprep.subr.mxu0 0.0
        %917 = vmatpush1.msra.mxu0 %v642
        %918 = vmatprep.subr.mxu0 0.0
        %919 = vmatpush1.msra.mxu0 %v643
        %920 = vmatprep.subr.mxu0 0.0
        %921 = vmatpush1.msra.mxu0 %v644
        %922 = vmatprep.subr.mxu0 0.0
        %923 = vmatpush1.msra.mxu0 %v645
        %924 = vmatprep.subr.mxu0 0.0
        %925 = vmatpush1.msra.mxu0 0.0
        %926 = vmatprep.subr.mxu0 0.0
        %927 = vmatpush1.msra.mxu0 0.0
        %928 = vmatprep.subr.mxu0 0.0
        %929 = vmatpush1.msra.mxu0 0.0
        %930 = vmatprep.subr.mxu0 0.0
        %931 = vmatpush1.msra.mxu0 0.0
        %932 = vmatprep.subr.mxu0 0.0
        %933 = vmatpush1.msra.mxu0 0.0
        %934 = vmatprep.subr.mxu0 0.0
        %935 = vmatpush1.msra.mxu0 0.0
        %936 = vmatprep.subr.mxu0 0.0
        %937 = vmatpush1.msra.mxu0 0.0
        %938 = vmatprep.subr.mxu0 0.0
        %939 = vmatpush1.msra.mxu0 0.0
        %940 = vmatprep.subr.mxu0 0.0
        %941 = vmatpush1.msra.mxu0 0.0
        %942 = vmatprep.subr.mxu0 0.0
        %943 = vmatpush1.msra.mxu0 0.0
        %944 = vmatprep.subr.mxu0 0.0
        %945 = vmatpush1.msra.mxu0 0.0
        %946 = vmatprep.subr.mxu0 0.0
        %947 = vmatpush1.msra.mxu0 0.0
        %948 = vmatprep.subr.mxu0 0.0
        %949 = vmatpush1.msra.mxu0 0.0
        %950 = vmatprep.subr.mxu0 0.0
        %951 = vmatpush1.msra.mxu0 0.0
        %952 = vmatprep.subr.mxu0 0.0
        %953 = vmatpush1.msra.mxu0 0.0
        %954 = vmatprep.subr.mxu0 0.0
        %955 = vmatpush1.msra.mxu0 0.0
        %956 = vmatprep.subr.mxu0 0.0
        %957 = vmatpush1.msra.mxu0 0.0
        %958 = vmatprep.subr.mxu0 0.0
        %959 = vmatpush1.msra.mxu0 0.0
        %960 = vmatprep.subr.mxu0 0.0
        %961 = vmatpush1.msra.mxu0 0.0
        %962 = vmatprep.subr.mxu0 0.0
        %963 = vmatpush1.msra.mxu0 0.0
        %964 = vmatprep.subr.mxu0 0.0
        %965 = vmatpush1.msra.mxu0 0.0
        %966 = vmatprep.subr.mxu0 0.0
        %967 = vmatpush1.msra.mxu0 0.0
        %968 = vmatprep.subr.mxu0 0.0
        %969 = vmatpush1.msra.mxu0 0.0
        %970 = vmatprep.subr.mxu0 0.0
        %971 = vmatpush1.msra.mxu0 0.0
        %972 = vmatprep.subr.mxu0 0.0
        %973 = vmatpush1.msra.mxu0 0.0
        %974 = vmatprep.subr.mxu0 0.0
        %975 = vmatpush1.msra.mxu0 0.0
        %976 = vmatprep.subr.mxu0 0.0
        %977 = vmatpush1.msra.mxu0 0.0
        %978 = vmatprep.subr.mxu0 0.0
        %979 = vmatpush1.msra.mxu0 0.0
        %980 = vmatprep.mubr.f32.mxu0 0.0
        %981 = vmatmul.mubr.f32.gmra.mrb[0].mxu0 %v912
        %v982 = vpop.f32.mrb[0].mxu0
        %v983 = vadd.f32 %v899, %v982
        %v984 = vpop.f32.mrb[0].mxu0
        %985 = vmatprep.mubr.f32.mxu0 0.0
        %986 = vmatmul.mubr.f32.gmra.mrb[0].mxu0 %v914
        %v987 = vpop.f32.mrb[0].mxu0
        %v988 = vadd.f32 %v904, %v987
        %v989 = vpop.f32.mrb[0].mxu0
        %990 = vdwg.mxu0
        %s991 = scalar_lea.vmem %s3, 128
        %v992 = vld [vmem:[%s991] sm:$0xff]
        %v993 = vld [vmem:[%s991 + $0x8] sm:$0xff]
        %v994 = vld [vmem:[%s991 + $0x10] sm:$0xff]
        %v995 = vld [vmem:[%s991 + $0x18] sm:$0xff]
        %v996 = vrot.slane %v634, 4
        %v997 = vrot.slane %v635, 4
        %v998 = vsel %vm277, %v996, %v997
        %v999 = vrot.slane %v636, 4
        %v1000 = vsel %vm277, %v997, %v999
        %v1001 = vsel %vm659, %v998, 0
        %v1003 = vsel %vm659, %v1000, 0
        %1005 = vmatprep.subr.mxu0 0.0
        %1006 = vmatpush1.msra.mxu0 %v992
        %1007 = vmatprep.subr.mxu0 0.0
        %1008 = vmatpush1.msra.mxu0 %v993
        %1009 = vmatprep.subr.mxu0 0.0
        %1010 = vmatpush1.msra.mxu0 %v994
        %1011 = vmatprep.subr.mxu0 0.0
        %1012 = vmatpush1.msra.mxu0 %v995
        %1013 = vmatprep.subr.mxu0 0.0
        %1014 = vmatpush1.msra.mxu0 0.0
        %1015 = vmatprep.subr.mxu0 0.0
        %1016 = vmatpush1.msra.mxu0 0.0
        %1017 = vmatprep.subr.mxu0 0.0
        %1018 = vmatpush1.msra.mxu0 0.0
        %1019 = vmatprep.subr.mxu0 0.0
        %1020 = vmatpush1.msra.mxu0 0.0
        %1021 = vmatprep.subr.mxu0 0.0
        %1022 = vmatpush1.msra.mxu0 0.0
        %1023 = vmatprep.subr.mxu0 0.0
        %1024 = vmatpush1.msra.mxu0 0.0
        %1025 = vmatprep.subr.mxu0 0.0
        %1026 = vmatpush1.msra.mxu0 0.0
        %1027 = vmatprep.subr.mxu0 0.0
        %1028 = vmatpush1.msra.mxu0 0.0
        %1029 = vmatprep.subr.mxu0 0.0
        %1030 = vmatpush1.msra.mxu0 0.0
        %1031 = vmatprep.subr.mxu0 0.0
        %1032 = vmatpush1.msra.mxu0 0.0
        %1033 = vmatprep.subr.mxu0 0.0
        %1034 = vmatpush1.msra.mxu0 0.0
        %1035 = vmatprep.subr.mxu0 0.0
        %1036 = vmatpush1.msra.mxu0 0.0
        %1037 = vmatprep.subr.mxu0 0.0
        %1038 = vmatpush1.msra.mxu0 0.0
        %1039 = vmatprep.subr.mxu0 0.0
        %1040 = vmatpush1.msra.mxu0 0.0
        %1041 = vmatprep.subr.mxu0 0.0
        %1042 = vmatpush1.msra.mxu0 0.0
        %1043 = vmatprep.subr.mxu0 0.0
        %1044 = vmatpush1.msra.mxu0 0.0
        %1045 = vmatprep.subr.mxu0 0.0
        %1046 = vmatpush1.msra.mxu0 0.0
        %1047 = vmatprep.subr.mxu0 0.0
        %1048 = vmatpush1.msra.mxu0 0.0
        %1049 = vmatprep.subr.mxu0 0.0
        %1050 = vmatpush1.msra.mxu0 0.0
        %1051 = vmatprep.subr.mxu0 0.0
        %1052 = vmatpush1.msra.mxu0 0.0
        %1053 = vmatprep.subr.mxu0 0.0
        %1054 = vmatpush1.msra.mxu0 0.0
        %1055 = vmatprep.subr.mxu0 0.0
        %1056 = vmatpush1.msra.mxu0 0.0
        %1057 = vmatprep.subr.mxu0 0.0
        %1058 = vmatpush1.msra.mxu0 0.0
        %1059 = vmatprep.subr.mxu0 0.0
        %1060 = vmatpush1.msra.mxu0 0.0
        %1061 = vmatprep.subr.mxu0 0.0
        %1062 = vmatpush1.msra.mxu0 0.0
        %1063 = vmatprep.subr.mxu0 0.0
        %1064 = vmatpush1.msra.mxu0 0.0
        %1065 = vmatprep.subr.mxu0 0.0
        %1066 = vmatpush1.msra.mxu0 0.0
        %1067 = vmatprep.subr.mxu0 0.0
        %1068 = vmatpush1.msra.mxu0 0.0
        %1069 = vmatprep.mubr.f32.mxu0 0.0
        %1070 = vmatmul.mubr.f32.gmra.mrb[0].mxu0 %v1001
        %v1071 = vpop.f32.mrb[0].mxu0
        %v1072 = vadd.f32 0.0, %v1071
        %v1073 = vpop.f32.mrb[0].mxu0
        %1074 = vmatprep.mubr.f32.mxu0 0.0
        %1075 = vmatmul.mubr.f32.gmra.mrb[0].mxu0 %v1003
        %v1076 = vpop.f32.mrb[0].mxu0
        %v1077 = vadd.f32 0.0, %v1076
        %v1078 = vpop.f32.mrb[0].mxu0
        %1079 = vdwg.mxu0
        %v1080 = vadd.f32 %v810, %v1072
        %v1081 = vadd.f32 %v815, %v1077
        %s1082 = scalar_lea.vmem %s3, 160
        %v1083 = vld [vmem:[%s1082] sm:$0xff]
        %v1084 = vld [vmem:[%s1082 + $0x8] sm:$0xff]
        %v1085 = vld [vmem:[%s1082 + $0x10] sm:$0xff]
        %v1086 = vld [vmem:[%s1082 + $0x18] sm:$0xff]
        %v1087 = vrot.slane %v634, 5
        %v1088 = vrot.slane %v635, 5
        %v1089 = vsel %vm529, %v1087, %v1088
        %v1090 = vrot.slane %v636, 5
        %v1091 = vsel %vm529, %v1088, %v1090
        %v1092 = vsel %vm659, %v1089, 0
        %v1094 = vsel %vm659, %v1091, 0
        %1096 = vmatprep.subr.mxu0 0.0
        %1097 = vmatpush1.msra.mxu0 %v1083
        %1098 = vmatprep.subr.mxu0 0.0
        %1099 = vmatpush1.msra.mxu0 %v1084
        %1100 = vmatprep.subr.mxu0 0.0
        %1101 = vmatpush1.msra.mxu0 %v1085
        %1102 = vmatprep.subr.mxu0 0.0
        %1103 = vmatpush1.msra.mxu0 %v1086
        %1104 = vmatprep.subr.mxu0 0.0
        %1105 = vmatpush1.msra.mxu0 0.0
        %1106 = vmatprep.subr.mxu0 0.0
        %1107 = vmatpush1.msra.mxu0 0.0
        %1108 = vmatprep.subr.mxu0 0.0
        %1109 = vmatpush1.msra.mxu0 0.0
        %1110 = vmatprep.subr.mxu0 0.0
        %1111 = vmatpush1.msra.mxu0 0.0
        %1112 = vmatprep.subr.mxu0 0.0
        %1113 = vmatpush1.msra.mxu0 0.0
        %1114 = vmatprep.subr.mxu0 0.0
        %1115 = vmatpush1.msra.mxu0 0.0
        %1116 = vmatprep.subr.mxu0 0.0
        %1117 = vmatpush1.msra.mxu0 0.0
        %1118 = vmatprep.subr.mxu0 0.0
        %1119 = vmatpush1.msra.mxu0 0.0
        %1120 = vmatprep.subr.mxu0 0.0
        %1121 = vmatpush1.msra.mxu0 0.0
        %1122 = vmatprep.subr.mxu0 0.0
        %1123 = vmatpush1.msra.mxu0 0.0
        %1124 = vmatprep.subr.mxu0 0.0
        %1125 = vmatpush1.msra.mxu0 0.0
        %1126 = vmatprep.subr.mxu0 0.0
        %1127 = vmatpush1.msra.mxu0 0.0
        %1128 = vmatprep.subr.mxu0 0.0
        %1129 = vmatpush1.msra.mxu0 0.0
        %1130 = vmatprep.subr.mxu0 0.0
        %1131 = vmatpush1.msra.mxu0 0.0
        %1132 = vmatprep.subr.mxu0 0.0
        %1133 = vmatpush1.msra.mxu0 0.0
        %1134 = vmatprep.subr.mxu0 0.0
        %1135 = vmatpush1.msra.mxu0 0.0
        %1136 = vmatprep.subr.mxu0 0.0
        %1137 = vmatpush1.msra.mxu0 0.0
        %1138 = vmatprep.subr.mxu0 0.0
        %1139 = vmatpush1.msra.mxu0 0.0
        %1140 = vmatprep.subr.mxu0 0.0
        %1141 = vmatpush1.msra.mxu0 0.0
        %1142 = vmatprep.subr.mxu0 0.0
        %1143 = vmatpush1.msra.mxu0 0.0
        %1144 = vmatprep.subr.mxu0 0.0
        %1145 = vmatpush1.msra.mxu0 0.0
        %1146 = vmatprep.subr.mxu0 0.0
        %1147 = vmatpush1.msra.mxu0 0.0
        %1148 = vmatprep.subr.mxu0 0.0
        %1149 = vmatpush1.msra.mxu0 0.0
        %1150 = vmatprep.subr.mxu0 0.0
        %1151 = vmatpush1.msra.mxu0 0.0
        %1152 = vmatprep.subr.mxu0 0.0
        %1153 = vmatpush1.msra.mxu0 0.0
        %1154 = vmatprep.subr.mxu0 0.0
        %1155 = vmatpush1.msra.mxu0 0.0
        %1156 = vmatprep.subr.mxu0 0.0
        %1157 = vmatpush1.msra.mxu0 0.0
        %1158 = vmatprep.subr.mxu0 0.0
        %1159 = vmatpush1.msra.mxu0 0.0
        %1160 = vmatprep.mubr.f32.mxu0 0.0
        %1161 = vmatmul.mubr.f32.gmra.mrb[0].mxu0 %v1092
        %v1162 = vpop.f32.mrb[0].mxu0
        %v1163 = vadd.f32 0.0, %v1162
        %v1164 = vpop.f32.mrb[0].mxu0
        %1165 = vmatprep.mubr.f32.mxu0 0.0
        %1166 = vmatmul.mubr.f32.gmra.mrb[0].mxu0 %v1094
        %v1167 = vpop.f32.mrb[0].mxu0
        %v1168 = vadd.f32 0.0, %v1167
        %v1169 = vpop.f32.mrb[0].mxu0
        %1170 = vdwg.mxu0
        %v1171 = vadd.f32 %v983, %v1163
        %v1172 = vadd.f32 %v988, %v1168
        %s1173 = scalar_lea.vmem %s3, 192
        %v1174 = vld [vmem:[%s1173] sm:$0xff]
        %v1175 = vld [vmem:[%s1173 + $0x8] sm:$0xff]
        %v1176 = vld [vmem:[%s1173 + $0x10] sm:$0xff]
        %v1177 = vld [vmem:[%s1173 + $0x18] sm:$0xff]
        %v1178 = vrot.slane %v634, 6
        %v1179 = vrot.slane %v635, 6
        %v1180 = vsel %vm527, %v1178, %v1179
        %v1181 = vrot.slane %v636, 6
        %v1182 = vsel %vm527, %v1179, %v1181
        %v1183 = vsel %vm659, %v1180, 0
        %v1185 = vsel %vm659, %v1182, 0
        %1187 = vmatprep.subr.mxu0 0.0
        %1188 = vmatpush1.msra.mxu0 %v1174
        %1189 = vmatprep.subr.mxu0 0.0
        %1190 = vmatpush1.msra.mxu0 %v1175
        %1191 = vmatprep.subr.mxu0 0.0
        %1192 = vmatpush1.msra.mxu0 %v1176
        %1193 = vmatprep.subr.mxu0 0.0
        %1194 = vmatpush1.msra.mxu0 %v1177
        %1195 = vmatprep.subr.mxu0 0.0
        %1196 = vmatpush1.msra.mxu0 0.0
        %1197 = vmatprep.subr.mxu0 0.0
        %1198 = vmatpush1.msra.mxu0 0.0
        %1199 = vmatprep.subr.mxu0 0.0
        %1200 = vmatpush1.msra.mxu0 0.0
        %1201 = vmatprep.subr.mxu0 0.0
        %1202 = vmatpush1.msra.mxu0 0.0
        %1203 = vmatprep.subr.mxu0 0.0
        %1204 = vmatpush1.msra.mxu0 0.0
        %1205 = vmatprep.subr.mxu0 0.0
        %1206 = vmatpush1.msra.mxu0 0.0
        %1207 = vmatprep.subr.mxu0 0.0
        %1208 = vmatpush1.msra.mxu0 0.0
        %1209 = vmatprep.subr.mxu0 0.0
        %1210 = vmatpush1.msra.mxu0 0.0
        %1211 = vmatprep.subr.mxu0 0.0
        %1212 = vmatpush1.msra.mxu0 0.0
        %1213 = vmatprep.subr.mxu0 0.0
        %1214 = vmatpush1.msra.mxu0 0.0
        %1215 = vmatprep.subr.mxu0 0.0
        %1216 = vmatpush1.msra.mxu0 0.0
        %1217 = vmatprep.subr.mxu0 0.0
        %1218 = vmatpush1.msra.mxu0 0.0
        %1219 = vmatprep.subr.mxu0 0.0
        %1220 = vmatpush1.msra.mxu0 0.0
        %1221 = vmatprep.subr.mxu0 0.0
        %1222 = vmatpush1.msra.mxu0 0.0
        %1223 = vmatprep.subr.mxu0 0.0
        %1224 = vmatpush1.msra.mxu0 0.0
        %1225 = vmatprep.subr.mxu0 0.0
        %1226 = vmatpush1.msra.mxu0 0.0
        %1227 = vmatprep.subr.mxu0 0.0
        %1228 = vmatpush1.msra.mxu0 0.0
        %1229 = vmatprep.subr.mxu0 0.0
        %1230 = vmatpush1.msra.mxu0 0.0
        %1231 = vmatprep.subr.mxu0 0.0
        %1232 = vmatpush1.msra.mxu0 0.0
        %1233 = vmatprep.subr.mxu0 0.0
        %1234 = vmatpush1.msra.mxu0 0.0
        %1235 = vmatprep.subr.mxu0 0.0
        %1236 = vmatpush1.msra.mxu0 0.0
        %1237 = vmatprep.subr.mxu0 0.0
        %1238 = vmatpush1.msra.mxu0 0.0
        %1239 = vmatprep.subr.mxu0 0.0
        %1240 = vmatpush1.msra.mxu0 0.0
        %1241 = vmatprep.subr.mxu0 0.0
        %1242 = vmatpush1.msra.mxu0 0.0
        %1243 = vmatprep.subr.mxu0 0.0
        %1244 = vmatpush1.msra.mxu0 0.0
        %1245 = vmatprep.subr.mxu0 0.0
        %1246 = vmatpush1.msra.mxu0 0.0
        %1247 = vmatprep.subr.mxu0 0.0
        %1248 = vmatpush1.msra.mxu0 0.0
        %1249 = vmatprep.subr.mxu0 0.0
        %1250 = vmatpush1.msra.mxu0 0.0
        %1251 = vmatprep.mubr.f32.mxu0 0.0
        %1252 = vmatmul.mubr.f32.gmra.mrb[0].mxu0 %v1183
        %v1253 = vpop.f32.mrb[0].mxu0
        %v1254 = vadd.f32 0.0, %v1253
        %v1255 = vpop.f32.mrb[0].mxu0
        %1256 = vmatprep.mubr.f32.mxu0 0.0
        %1257 = vmatmul.mubr.f32.gmra.mrb[0].mxu0 %v1185
        %v1258 = vpop.f32.mrb[0].mxu0
        %v1259 = vadd.f32 0.0, %v1258
        %v1260 = vpop.f32.mrb[0].mxu0
        %1261 = vdwg.mxu0
        %v1262 = vadd.f32 %v1080, %v1254
        %v1263 = vadd.f32 %v1081, %v1259
        %v1264 = vadd.f32 %v1262, %v1171
        %v1265 = vadd.f32 %v1263, %v1172
        %v1266 = vxor.u32 %v1264, 2147483648
        %v1267 = vxor.u32 %v1265, 2147483648
        %v1268 = vmul.f32 %v1266, 1.442695
        %v1269 = vpow.pop %v1268
        %v1270 = vmul.f32 %v1267, 1.442695
        %v1271 = vpow.pop %v1270
        %v1272 = vadd.f32 %v1269, 1.0
        %v1273 = vadd.f32 %v1271, 1.0
        %v1274 = vrcp.pop %v1272
        %v1275 = vmul.f32 1.0, %v1274
        %v1276 = vrcp.pop %v1273
        %v1277 = vmul.f32 1.0, %v1276
        %v1279 = vrot.slane %v1275, 1
        %1280 = vrot.lane.b32.xlu0 %v1279, 16
        %v1281 = vpop.permute.xlu0 %1280
        %v1283 = vrot.slane %v1275, 2
        %1284 = vrot.lane.b32.xlu0 %v1283, 32
        %v1285 = vpop.permute.xlu0 %1284
        %v1287 = vrot.slane %v1275, 3
        %1288 = vrot.lane.b32.xlu0 %v1287, 48
        %v1289 = vpop.permute.xlu0 %1288
        %v1291 = vrot.slane %v1275, 4
        %1292 = vrot.lane.b32.xlu0 %v1291, 64
        %v1293 = vpop.permute.xlu0 %1292
        %v1295 = vrot.slane %v1275, 5
        %1296 = vrot.lane.b32.xlu0 %v1295, 80
        %v1297 = vpop.permute.xlu0 %1296
        %v1299 = vrot.slane %v1275, 6
        %1300 = vrot.lane.b32.xlu0 %v1299, 96
        %v1301 = vpop.permute.xlu0 %1300
        %v1303 = vrot.slane %v1275, 7
        %1304 = vrot.lane.b32.xlu0 %v1303, 112
        %v1305 = vpop.permute.xlu0 %1304
        %v1308 = vrot.slane %v1277, 1
        %1309 = vrot.lane.b32.xlu0 %v1308, 16
        %v1310 = vpop.permute.xlu0 %1309
        %v1312 = vrot.slane %v1277, 2
        %1313 = vrot.lane.b32.xlu0 %v1312, 32
        %v1314 = vpop.permute.xlu0 %1313
        %v1316 = vrot.slane %v1277, 3
        %1317 = vrot.lane.b32.xlu0 %v1316, 48
        %v1318 = vpop.permute.xlu0 %1317
        %v1320 = vrot.slane %v1277, 4
        %1321 = vrot.lane.b32.xlu0 %v1320, 64
        %v1322 = vpop.permute.xlu0 %1321
        %v1324 = vrot.slane %v1277, 5
        %1325 = vrot.lane.b32.xlu0 %v1324, 80
        %v1326 = vpop.permute.xlu0 %1325
        %v1328 = vrot.slane %v1277, 6
        %1329 = vrot.lane.b32.xlu0 %v1328, 96
        %v1330 = vpop.permute.xlu0 %1329
        %v1332 = vrot.slane %v1277, 7
        %1333 = vrot.lane.b32.xlu0 %v1332, 112
        %v1334 = vpop.permute.xlu0 %1333
        %v1336 = vsel %vm633, %v1275, %v1281
        %v1337 = vsel %vm659, %v1336, %v1285
        %vm1338 = vcmask 392192
        %v1339 = vsel %vm1338, %v1337, %v1289
        %vm1340 = vcmask 523264
        %v1341 = vsel %vm1340, %v1339, %v1293
        %vm1342 = vcmask 654336
        %v1343 = vsel %vm1342, %v1341, %v1297
        %vm1344 = vcmask 785408
        %v1345 = vsel %vm1344, %v1343, %v1301
        %vm1346 = vcmask 916480
        %v1347 = vsel %vm1346, %v1345, %v1305
        %v1348 = vsel %vm633, %v1277, %v1310
        %v1349 = vsel %vm659, %v1348, %v1314
        %v1350 = vsel %vm1338, %v1349, %v1318
        %v1351 = vsel %vm1340, %v1350, %v1322
        %v1352 = vsel %vm1342, %v1351, %v1326
        %v1353 = vsel %vm1344, %v1352, %v1330
        %v1354 = vsel %vm1346, %v1353, %v1334
        %v1355 = vlaneseq
        %v1356 = vshrl.u32 %v1355, 7
        %v1357 = vsub.s32 0, %v1356
        %v1358 = vrot.slane %v1347, %v1357
        %v1359 = vlaneseq
        %v1360 = vshrl.u32 %v1359, 7
        %v1361 = vsub.s32 0, %v1360
        %v1362 = vrot.slane %v1354, %v1361
        %v1365 = vcombine.low %v1358, %v1362
        %v1367 = vmul.f32 %v369, %v1365
        %1368 = vst [vmem:[%s190] sm:$0xff] %v1367
        %s1369 = sand.u32 %s115, 1
        %s1370 = scalar_lea.sflag [#allocation3], %s1369
        %s1371 = sand.u32 %s115, 1
        %s1372 = smul.addr %s1371, 8
        %s1373 = scalar_lea.vmem [#allocation2], %s1372
        // Predicated region
        $region37: #{tpu_custom_call.1} parent=35 // pred_check
          %p1374 = pneg %p125
        $region38: #{tpu_custom_call.1} parent=35 // pred_check_branch
          %1376 = sbr.rel (%p1374) target = $region40
        $region39: #{tpu_custom_call.1} parent=35 // pred_region
          %s1378 = ssub.s32 128, 128
          %1379 = vsyncadd %s1370, %s1378
          %s1380 = smul.addr %s18, 2
          %s1381 = smul.addr %s1380, 64
          %s1382 = scalar_lea.hbm %s4, %s1381
          %s1384 = sshll.u32 %s1373, 4
          %s1385 = int_to_ptr.vmem [resolvable:$true] %s1384
          %1387 = dma.vmem_to_hbm [thread:$0]  %s1385, 128, %s1382, %s1370
        $region40: #{tpu_custom_call.1} parent=35 // pred_fallthru
          _
      $region36: #{tpu_custom_call.1} parent=5 // pred_fallthru
        _
      %p1388 = scmp.le.s32.totalorder 2, %s13
      // Predicated region
      $region41: #{tpu_custom_call.1} parent=5 // pred_check
        %p1389 = pneg %p1388
      $region42: #{tpu_custom_call.1} parent=5 // pred_check_branch
        %1391 = sbr.rel (%p1389) target = $region44
      $region43: #{tpu_custom_call.1} parent=5 // pred_region
        %s1392 = ssub.s32 %s13, 2
        // Predicated region
        $region45: #{tpu_custom_call.1} parent=43 // pred_check
          %p1393 = pneg %p131
        $region46: #{tpu_custom_call.1} parent=43 // pred_check_branch
          %1395 = sbr.rel (%p1393) target = $region48
        $region47: #{tpu_custom_call.1} parent=43 // pred_region
          %s1396 = sand.u32 %s116, 1
          %s1397 = scalar_lea.sflag [#allocation3], %s1396
          %s1398 = sand.u32 %s116, 1
          %s1399 = smul.addr %s1398, 8
          %s1400 = scalar_lea.vmem [#allocation2], %s1399
          %1401 = dma.done %s1397, 128
        $region48: #{tpu_custom_call.1} parent=43 // pred_fallthru
          _
      $region44: #{tpu_custom_call.1} parent=5 // pred_fallthru
        _
    $region6: #{tpu_custom_call.1} parent=1 // loop_footer
      %s17 = sadd.s32 1, %s13
    $region7: #{tpu_custom_call.1} parent=1 // loop_footer_branch
      %12 = sbr.rel target = $region3
    $region8: #{tpu_custom_call.1} parent=1 // loop_exit
      _
    %1402 = vsyncpa [#allocation3], 1
    %s1403 = scalar_lea.sflag [#allocation3], 1
    %1404 = vsyncpa %s1403, 1

</llo_original>
